<compile_context>
chip_gen: v7x
topology: tpu7x:2x2x1
jax: 0.10.0
libtpu: 0.0.40
codegen_flags: <defaults>
</compile_context>

<pallas_src>
import jax
import jax.numpy as jnp
from jax.experimental import pallas as pl
from jax.experimental.pallas import tpu as pltpu

EXPANSION = 4
BN_EPS = 1e-5


# ---------------------------------------------------------------------------
# Pallas kernel: one (batch, row-strip) tile per grid step.
# ---------------------------------------------------------------------------
def _bottleneck_kernel(x_ref,                     # (TILE_H, W, Cin)  f32 body rows
                       xh_ref,                    # (2, W, Cin)       f32 halo rows
                       w1_ref, s1_ref, b1_ref,    # (Cin, P) bf16, (1, P) f32 x2
                       w2_ref, s2_ref, b2_ref,    # (3, 3P, P) bf16, (1, P) f32 x2
                       w3_ref, s3_ref, b3_ref,    # (P, Cout) bf16, (1, Cout) f32 x2
                       o_ref,                     # (TILE_H, W, Cout)
                       pad_ref):                  # VMEM scratch (TILE_H+2, W+2, P) f32
    th, w, cin = x_ref.shape
    p = w1_ref.shape[1]
    cout = w3_ref.shape[1]
    hi = pl.program_id(1)
    hlast = pl.num_programs(1) - 1

    # ---- conv1 (1x1) + bn1 + relu : strip body rows (bf16 MXU, f32 accum) ----
    xb = x_ref[...].astype(jnp.bfloat16).reshape(th * w, cin)
    h1 = jnp.dot(xb, w1_ref[...], preferred_element_type=jnp.float32)
    h1 = jnp.maximum(h1 * s1_ref[...] + b1_ref[...], 0.0)           # (th*w, p)

    # ---- conv1 (1x1) + bn1 + relu : the two halo rows ------------------------
    xh = xh_ref[...].astype(jnp.bfloat16).reshape(2 * w, cin)
    h1h = jnp.dot(xh, w1_ref[...], preferred_element_type=jnp.float32)
    h1h = jnp.maximum(h1h * s1_ref[...] + b1_ref[...], 0.0)         # (2*w, p)

    # Halo rows that lie outside the image implement conv2's zero padding.
    top_gate = (hi > 0).astype(jnp.float32)
    bot_gate = (hi < hlast).astype(jnp.float32)

    # ---- scatter h1 into the persistent zero-padded scratch -------------------
    zcol = jnp.zeros((th + 2, 1, p), jnp.float32)
    pad_ref[:, 0:1, :] = zcol                                       # left pad col
    pad_ref[:, w + 1:w + 2, :] = zcol                               # right pad col
    pad_ref[1:th + 1, 1:w + 1, :] = h1.reshape(th, w, p)
    pad_ref[0:1, 1:w + 1, :] = (h1h[:w] * top_gate).reshape(1, w, p)
    pad_ref[th + 1:th + 2, 1:w + 1, :] = (h1h[w:] * bot_gate).reshape(1, w, p)

    # ---- conv2 (3x3, stride 1, pad 1) + bn2 + relu -----------------------------
    # kx taps fused: one (th*w, 3P) @ (3P, P) matmul per ky.
    acc = jnp.zeros((th * w, p), jnp.float32)
    for ky in range(3):
        slab = jnp.concatenate(
            [pad_ref[ky:ky + th, kx:kx + w, :].astype(jnp.bfloat16)
             for kx in range(3)],
            axis=-1)                                                # (th, w, 3p)
        acc = acc + jnp.dot(slab.reshape(th * w, 3 * p), w2_ref[ky],
                            preferred_element_type=jnp.float32)
    h2 = jnp.maximum(acc * s2_ref[...] + b2_ref[...], 0.0)          # (th*w, p)

    # ---- conv3 (1x1) + bn3 + identity residual + relu --------------------------
    h3 = jnp.dot(h2.astype(jnp.bfloat16), w3_ref[...],
                 preferred_element_type=jnp.float32)
    h3 = h3 * s3_ref[...] + b3_ref[...]
    # Re-read the input block for the residual (keeps x out of the live set
    # during the conv2 section instead of pinning it from the top).
    res = x_ref[...].astype(jnp.float32).reshape(th * w, cout)
    out = jnp.maximum(h3 + res, 0.0)
    o_ref[...] = out.reshape(th, w, cout).astype(o_ref.dtype)


# ---------------------------------------------------------------------------
# Wrapper: NCHW in / NCHW out, BN folding, strip tiling, pallas_call plumbing.
# ---------------------------------------------------------------------------
def _fold_bn(gamma, beta, mean, var):
    scale = gamma / jnp.sqrt(var + BN_EPS)
    bias = beta - mean * scale
    return (scale[None, :].astype(jnp.float32),
            bias[None, :].astype(jnp.float32))      # (1, C) for lane broadcast


def _pick_tile_h(h):
    for t in (32, 16, 8):
        if h % t == 0 and h // t >= 2:
            return t
    return h                                        # single strip fallback


def bottleneck_pallas(x_nchw, params):
    n, cin, h, w = x_nchw.shape
    p = params["w1"].shape[0]                       # planes
    cout = params["w3"].shape[0]                    # planes * 4
    assert cout == cin, "identity residual requires inplanes == planes * 4"

    tile_h = _pick_tile_h(h)
    s = h // tile_h                                 # number of row strips

    # kernel-friendly weight layouts (bf16 operands for the MXU)
    w1 = jnp.transpose(params["w1"][:, :, 0, 0], (1, 0)).astype(jnp.bfloat16)
    w2 = jnp.transpose(params["w2"], (2, 3, 1, 0))                  # (ky,kx,ci,co)
    w2 = w2.reshape(3, 3 * p, p).astype(jnp.bfloat16)               # kx fused in K
    w3 = jnp.transpose(params["w3"][:, :, 0, 0], (1, 0)).astype(jnp.bfloat16)
    s1, b1 = _fold_bn(*params["bn1"])
    s2, b2 = _fold_bn(*params["bn2"])
    s3, b3 = _fold_bn(*params["bn3"])

    # NHWC activations + per-strip halo rows (row above / below each strip)
    x_nhwc = jnp.transpose(x_nchw, (0, 2, 3, 1))                    # (N, H, W, Cin)
    xp = jnp.pad(x_nhwc, ((0, 0), (1, 1), (0, 0), (0, 0)))
    top = xp[:, 0:h:tile_h]                                         # (N, S, W, Cin)
    bot = xp[:, tile_h + 1::tile_h]                                 # (N, S, W, Cin)
    x_halo = jnp.stack([top, bot], axis=2)                          # (N, S, 2, W, Cin)

    def _const_spec(a):
        nd = a.ndim
        return pl.BlockSpec(a.shape, lambda ni, hi, _nd=nd: (0,) * _nd)

    flops = 2 * n * h * w * (cin * p + 9 * p * p + p * cout)
    bytes_accessed = ((x_nhwc.size + n * h * w * cout + x_halo.size) * 4
                      + (w1.size + w2.size + w3.size) * 2
                      + (s1.size + b1.size + s2.size + b2.size
                         + s3.size + b3.size) * 4)

    out_nhwc = pl.pallas_call(
        _bottleneck_kernel,
        out_shape=jax.ShapeDtypeStruct((n, h, w, cout), x_nchw.dtype),
        grid_spec=pltpu.PrefetchScalarGridSpec(
            num_scalar_prefetch=0,
            grid=(n, s),
            in_specs=[
                pl.BlockSpec((None, tile_h, w, cin),
                             lambda ni, hi: (ni, hi, 0, 0)),
                pl.BlockSpec((None, None, 2, w, cin),
                             lambda ni, hi: (ni, hi, 0, 0, 0)),
                _const_spec(w1), _const_spec(s1), _const_spec(b1),
                _const_spec(w2), _const_spec(s2), _const_spec(b2),
                _const_spec(w3), _const_spec(s3), _const_spec(b3),
            ],
            out_specs=pl.BlockSpec((None, tile_h, w, cout),
                                   lambda ni, hi: (ni, hi, 0, 0)),
            scratch_shapes=[pltpu.VMEM((tile_h + 2, w + 2, p), jnp.float32)],
        ),
        compiler_params=pltpu.CompilerParams(
            dimension_semantics=("parallel", "parallel"),
            vmem_limit_bytes=48 * 1024 * 1024),
        cost_estimate=pl.CostEstimate(flops=int(flops), transcendentals=0,
                                      bytes_accessed=int(bytes_accessed)),
    )(x_nhwc, x_halo, w1, s1, b1, w2, s2, b2, w3, s3, b3)

    return jnp.transpose(out_nhwc, (0, 3, 1, 2))                    # back to NCHW


# ---------------------------------------------------------------------------
# Pure-JAX reference (mirrors the PyTorch forward, eval-mode BN, f32)
# ---------------------------------------------------------------------------
def _conv2d_nchw(x, w, stride=1, padding=0):
    return jax.lax.conv_general_dilated(
        x, w, (stride, stride), [(padding, padding), (padding, padding)],
        dimension_numbers=("NCHW", "OIHW", "NCHW"))


def _bn_nchw(x, gamma, beta, mean, var):
    scale = (gamma / jnp.sqrt(var + BN_EPS))[None, :, None, None]
    bias = (beta - mean * gamma / jnp.sqrt(var + BN_EPS))[None, :, None, None]
    return x * scale + bias


def bottleneck_reference(x, params):
    out = _conv2d_nchw(x, params["w1"])
    out = jax.nn.relu(_bn_nchw(out, *params["bn1"]))
    out = _conv2d_nchw(out, params["w2"], stride=1, padding=1)
    out = jax.nn.relu(_bn_nchw(out, *params["bn2"]))
    out = _conv2d_nchw(out, params["w3"])
    out = _bn_nchw(out, *params["bn3"])
    return jax.nn.relu(out + x)


# ---------------------------------------------------------------------------
# Deterministic parameter init + smoke test
# ---------------------------------------------------------------------------
def make_params(key, inplanes, planes):
    ks = jax.random.split(key, 6)
    cout = planes * EXPANSION

    def bn(k, c):
        k1, k2, k3, k4 = jax.random.split(k, 4)
        gamma = 1.0 + 0.2 * jax.random.normal(k1, (c,), jnp.float32)
        beta = 0.5 * jax.random.normal(k2, (c,), jnp.float32)
        mean = 0.5 * jax.random.normal(k3, (c,), jnp.float32)
        var = jnp.abs(1.0 + 0.2 * jax.random.normal(k4, (c,), jnp.float32))
        return (gamma, beta, mean, var)

    return {
        "w1": 0.1 * jax.random.normal(ks[0], (planes, inplanes, 1, 1), jnp.float32),
        "w2": 0.1 * jax.random.normal(ks[1], (planes, planes, 3, 3), jnp.float32),
        "w3": 0.1 * jax.random.normal(ks[2], (cout, planes, 1, 1), jnp.float32),
        "bn1": bn(ks[3], planes),
        "bn2": bn(ks[4], planes),
        "bn3": bn(ks[5], cout),
    }


if __name__ == "__main__":
    key = jax.random.PRNGKey(0)
    kx, kp = jax.random.split(key)

    # Small but layout-meaningful: 128 channels fill one full lane tile,
    # H=16 splits into two 8-row strips so the halo path is exercised.
    n, planes, hh, ww = 2, 32, 16, 16
    inplanes = planes * EXPANSION                   # 128, identity residual

    x = jax.random.normal(kx, (n, inplanes, hh, ww), jnp.float32)
    params = make_params(kp, inplanes, planes)

    out = jax.block_until_ready(bottleneck_pallas(x, params))
    ref = jax.block_until_ready(bottleneck_reference(x, params))

    assert out.shape == ref.shape
    err = float(jnp.max(jnp.abs(out - ref)))
    scale = float(jnp.max(jnp.abs(ref))) + 1.0
    # bf16 MXU operands with f32 accumulation vs. an all-f32 reference.
    assert err <= 2e-2 * scale, (err, scale)
    print("KERNEL_OK")
</pallas_src>

<mosaic_0001>
module attributes {stable_mosaic.version = 11 : i64} {
  func.func @_bottleneck_kernel(%arg0: i32, %arg1: i32, %arg2: memref<1x8x16x128xf32, #tpu.memory_space<vmem>>, %arg3: memref<1x1x2x16x128xf32, #tpu.memory_space<vmem>>, %arg4: memref<128x32xbf16, #tpu.memory_space<vmem>>, %arg5: memref<1x32xf32, #tpu.memory_space<vmem>>, %arg6: memref<1x32xf32, #tpu.memory_space<vmem>>, %arg7: memref<3x96x32xbf16, #tpu.memory_space<vmem>>, %arg8: memref<1x32xf32, #tpu.memory_space<vmem>>, %arg9: memref<1x32xf32, #tpu.memory_space<vmem>>, %arg10: memref<32x128xbf16, #tpu.memory_space<vmem>>, %arg11: memref<1x128xf32, #tpu.memory_space<vmem>>, %arg12: memref<1x128xf32, #tpu.memory_space<vmem>>, %arg13: memref<1x8x16x128xf32, #tpu.memory_space<vmem>>, %arg14: memref<10x18x32xf32, #tpu.memory_space<vmem>>) attributes {dimension_semantics = [#tpu.dimension_semantics<parallel>, #tpu.dimension_semantics<parallel>], iteration_bounds = array<i64: 2, 2>, scalar_prefetch = 0 : i64, scratch_operands = 1 : i64, tpu.core_type = #tpu.core_type<tc>, window_params = [{transform_indices = @transform_0, window_bounds = array<i64: 1, 8, 16, 128>}, {transform_indices = @transform_1, window_bounds = array<i64: 1, 1, 2, 16, 128>}, {pipeline_mode = #tpu.pipeline_mode<synchronous>, transform_indices = @transform_2, window_bounds = array<i64: 128, 32>}, {pipeline_mode = #tpu.pipeline_mode<synchronous>, transform_indices = @transform_3, window_bounds = array<i64: 1, 32>}, {pipeline_mode = #tpu.pipeline_mode<synchronous>, transform_indices = @transform_4, window_bounds = array<i64: 1, 32>}, {pipeline_mode = #tpu.pipeline_mode<synchronous>, transform_indices = @transform_5, window_bounds = array<i64: 3, 96, 32>}, {pipeline_mode = #tpu.pipeline_mode<synchronous>, transform_indices = @transform_6, window_bounds = array<i64: 1, 32>}, {pipeline_mode = #tpu.pipeline_mode<synchronous>, transform_indices = @transform_7, window_bounds = array<i64: 1, 32>}, {pipeline_mode = #tpu.pipeline_mode<synchronous>, transform_indices = @transform_8, window_bounds = array<i64: 32, 128>}, {pipeline_mode = #tpu.pipeline_mode<synchronous>, transform_indices = @transform_9, window_bounds = array<i64: 1, 128>}, {pipeline_mode = #tpu.pipeline_mode<synchronous>, transform_indices = @transform_10, window_bounds = array<i64: 1, 128>}, {transform_indices = @transform_11, window_bounds = array<i64: 1, 8, 16, 128>}]} {
    %c0 = arith.constant 0 : index
    %c0_0 = arith.constant 0 : index
    %c0_1 = arith.constant 0 : index
    %c0_2 = arith.constant 0 : index
    %0 = vector.load %arg2[%c0, %c0_0, %c0_1, %c0_2] : memref<1x8x16x128xf32, #tpu.memory_space<vmem>>, vector<1x8x16x128xf32>
    %1 = vector.shape_cast %0 : vector<1x8x16x128xf32> to vector<8x16x128xf32>
    %2 = arith.truncf %1 : vector<8x16x128xf32> to vector<8x16x128xbf16>
    %3 = vector.shape_cast %2 : vector<8x16x128xbf16> to vector<128x128xbf16>
    %c0_3 = arith.constant 0 : index
    %c0_4 = arith.constant 0 : index
    %4 = vector.load %arg4[%c0_3, %c0_4] : memref<128x32xbf16, #tpu.memory_space<vmem>>, vector<128x32xbf16>
    %cst = arith.constant dense<0.000000e+00> : vector<128x32xf32>
    %5 = tpu.matmul %3, %4, %cst {dimension_numbers = #tpu.dot_dimension_numbers<[1], [0], [0], [1], [0, 0, 1, 1], [], []>} : vector<128x128xbf16>, vector<128x32xbf16>, vector<128x32xf32> -> vector<128x32xf32>
    %c0_5 = arith.constant 0 : index
    %c0_6 = arith.constant 0 : index
    %6 = vector.load %arg5[%c0_5, %c0_6] : memref<1x32xf32, #tpu.memory_space<vmem>>, vector<1x32xf32>
    %7 = vector.broadcast %6 : vector<1x32xf32> to vector<128x32xf32>
    %8 = arith.mulf %5, %7 : vector<128x32xf32>
    %c0_7 = arith.constant 0 : index
    %c0_8 = arith.constant 0 : index
    %9 = vector.load %arg6[%c0_7, %c0_8] : memref<1x32xf32, #tpu.memory_space<vmem>>, vector<1x32xf32>
    %10 = vector.broadcast %9 : vector<1x32xf32> to vector<128x32xf32>
    %11 = arith.addf %8, %10 : vector<128x32xf32>
    %cst_9 = arith.constant 0.000000e+00 : f32
    %12 = vector.broadcast %cst_9 : f32 to vector<128x32xf32>
    %13 = arith.maximumf %11, %12 : vector<128x32xf32>
    %c0_10 = arith.constant 0 : index
    %c0_11 = arith.constant 0 : index
    %c0_12 = arith.constant 0 : index
    %c0_13 = arith.constant 0 : index
    %c0_14 = arith.constant 0 : index
    %14 = vector.load %arg3[%c0_10, %c0_11, %c0_12, %c0_13, %c0_14] : memref<1x1x2x16x128xf32, #tpu.memory_space<vmem>>, vector<1x1x2x16x128xf32>
    %15 = vector.shape_cast %14 : vector<1x1x2x16x128xf32> to vector<2x16x128xf32>
    %16 = arith.truncf %15 : vector<2x16x128xf32> to vector<2x16x128xbf16>
    %17 = vector.shape_cast %16 : vector<2x16x128xbf16> to vector<32x128xbf16>
    %c0_15 = arith.constant 0 : index
    %c0_16 = arith.constant 0 : index
    %18 = vector.load %arg4[%c0_15, %c0_16] : memref<128x32xbf16, #tpu.memory_space<vmem>>, vector<128x32xbf16>
    %cst_17 = arith.constant dense<0.000000e+00> : vector<32x32xf32>
    %19 = tpu.matmul %17, %18, %cst_17 {dimension_numbers = #tpu.dot_dimension_numbers<[1], [0], [0], [1], [0, 0, 1, 1], [], []>} : vector<32x128xbf16>, vector<128x32xbf16>, vector<32x32xf32> -> vector<32x32xf32>
    %c0_18 = arith.constant 0 : index
    %c0_19 = arith.constant 0 : index
    %20 = vector.load %arg5[%c0_18, %c0_19] : memref<1x32xf32, #tpu.memory_space<vmem>>, vector<1x32xf32>
    %21 = vector.broadcast %20 : vector<1x32xf32> to vector<32x32xf32>
    %22 = arith.mulf %19, %21 : vector<32x32xf32>
    %c0_20 = arith.constant 0 : index
    %c0_21 = arith.constant 0 : index
    %23 = vector.load %arg6[%c0_20, %c0_21] : memref<1x32xf32, #tpu.memory_space<vmem>>, vector<1x32xf32>
    %24 = vector.broadcast %23 : vector<1x32xf32> to vector<32x32xf32>
    %25 = arith.addf %22, %24 : vector<32x32xf32>
    %cst_22 = arith.constant 0.000000e+00 : f32
    %26 = vector.broadcast %cst_22 : f32 to vector<32x32xf32>
    %27 = arith.maximumf %25, %26 : vector<32x32xf32>
    %c0_i32 = arith.constant 0 : i32
    %28 = arith.cmpi sgt, %arg1, %c0_i32 : i32
    %29 = arith.extui %28 : i1 to i32
    %30 = arith.sitofp %29 : i32 to f32
    %c1_i32 = arith.constant 1 : i32
    %31 = arith.cmpi slt, %arg1, %c1_i32 : i32
    %32 = arith.extui %31 : i1 to i32
    %33 = arith.sitofp %32 : i32 to f32
    %cst_23 = arith.constant 0.000000e+00 : f32
    %34 = vector.broadcast %cst_23 : f32 to vector<10x1x32xf32>
    %c0_24 = arith.constant 0 : index
    %c0_25 = arith.constant 0 : index
    %c0_26 = arith.constant 0 : index
    %35 = vector.load %arg14[%c0_24, %c0_25, %c0_26] : memref<10x18x32xf32, #tpu.memory_space<vmem>>, vector<10x1x32xf32>
    tpu.vector_store %arg14[%c0_24, %c0_25, %c0_26], %34 {strides = array<i32>} : memref<10x18x32xf32, #tpu.memory_space<vmem>>, vector<10x1x32xf32>,
    %c0_27 = arith.constant 0 : index
    %c17 = arith.constant 17 : index
    %c0_28 = arith.constant 0 : index
    %36 = vector.load %arg14[%c0_27, %c17, %c0_28] : memref<10x18x32xf32, #tpu.memory_space<vmem>>, vector<10x1x32xf32>
    tpu.vector_store %arg14[%c0_27, %c17, %c0_28], %34 {strides = array<i32>} : memref<10x18x32xf32, #tpu.memory_space<vmem>>, vector<10x1x32xf32>,
    %37 = vector.shape_cast %13 : vector<128x32xf32> to vector<8x16x32xf32>
    %c1 = arith.constant 1 : index
    %c1_29 = arith.constant 1 : index
    %c0_30 = arith.constant 0 : index
    %38 = vector.load %arg14[%c1, %c1_29, %c0_30] : memref<10x18x32xf32, #tpu.memory_space<vmem>>, vector<8x16x32xf32>
    tpu.vector_store %arg14[%c1, %c1_29, %c0_30], %37 {strides = array<i32>} : memref<10x18x32xf32, #tpu.memory_space<vmem>>, vector<8x16x32xf32>,
    %39 = vector.extract_strided_slice %27 {offsets = [0, 0], sizes = [16, 32], strides = [1, 1]} : vector<32x32xf32> to vector<16x32xf32>
    %40 = vector.broadcast %30 : f32 to vector<16x32xf32>
    %41 = arith.mulf %39, %40 : vector<16x32xf32>
    %42 = vector.shape_cast %41 : vector<16x32xf32> to vector<1x16x32xf32>
    %c0_31 = arith.constant 0 : index
    %c1_32 = arith.constant 1 : index
    %c0_33 = arith.constant 0 : index
    %43 = vector.load %arg14[%c0_31, %c1_32, %c0_33] : memref<10x18x32xf32, #tpu.memory_space<vmem>>, vector<1x16x32xf32>
    tpu.vector_store %arg14[%c0_31, %c1_32, %c0_33], %42 {strides = array<i32>} : memref<10x18x32xf32, #tpu.memory_space<vmem>>, vector<1x16x32xf32>,
    %44 = vector.extract_strided_slice %27 {offsets = [16, 0], sizes = [16, 32], strides = [1, 1]} : vector<32x32xf32> to vector<16x32xf32>
    %45 = vector.broadcast %33 : f32 to vector<16x32xf32>
    %46 = arith.mulf %44, %45 : vector<16x32xf32>
    %47 = vector.shape_cast %46 : vector<16x32xf32> to vector<1x16x32xf32>
    %c9 = arith.constant 9 : index
    %c1_34 = arith.constant 1 : index
    %c0_35 = arith.constant 0 : index
    %48 = vector.load %arg14[%c9, %c1_34, %c0_35] : memref<10x18x32xf32, #tpu.memory_space<vmem>>, vector<1x16x32xf32>
    tpu.vector_store %arg14[%c9, %c1_34, %c0_35], %47 {strides = array<i32>} : memref<10x18x32xf32, #tpu.memory_space<vmem>>, vector<1x16x32xf32>,
    %cst_36 = arith.constant 0.000000e+00 : f32
    %49 = vector.broadcast %cst_36 : f32 to vector<128x32xf32>
    %c0_37 = arith.constant 0 : index
    %c0_38 = arith.constant 0 : index
    %c0_39 = arith.constant 0 : index
    %50 = vector.load %arg14[%c0_37, %c0_38, %c0_39] : memref<10x18x32xf32, #tpu.memory_space<vmem>>, vector<8x16x32xf32>
    %51 = arith.truncf %50 : vector<8x16x32xf32> to vector<8x16x32xbf16>
    %c0_40 = arith.constant 0 : index
    %c1_41 = arith.constant 1 : index
    %c0_42 = arith.constant 0 : index
    %52 = vector.load %arg14[%c0_40, %c1_41, %c0_42] : memref<10x18x32xf32, #tpu.memory_space<vmem>>, vector<8x16x32xf32>
    %53 = arith.truncf %52 : vector<8x16x32xf32> to vector<8x16x32xbf16>
    %c0_43 = arith.constant 0 : index
    %c2 = arith.constant 2 : index
    %c0_44 = arith.constant 0 : index
    %54 = vector.load %arg14[%c0_43, %c2, %c0_44] : memref<10x18x32xf32, #tpu.memory_space<vmem>>, vector<8x16x32xf32>
    %55 = arith.truncf %54 : vector<8x16x32xf32> to vector<8x16x32xbf16>
    %56 = tpu.concatenate %51, %53, %55 in 2 : vector<8x16x32xbf16>, vector<8x16x32xbf16>, vector<8x16x32xbf16> -> vector<8x16x96xbf16>
    %57 = vector.shape_cast %56 : vector<8x16x96xbf16> to vector<128x96xbf16>
    %c0_45 = arith.constant 0 : index
    %c0_46 = arith.constant 0 : index
    %c0_47 = arith.constant 0 : index
    %58 = vector.load %arg7[%c0_45, %c0_46, %c0_47] : memref<3x96x32xbf16, #tpu.memory_space<vmem>>, vector<1x96x32xbf16>
    %59 = vector.shape_cast %58 : vector<1x96x32xbf16> to vector<96x32xbf16>
    %cst_48 = arith.constant dense<0.000000e+00> : vector<128x32xf32>
    %60 = tpu.matmul %57, %59, %cst_48 {dimension_numbers = #tpu.dot_dimension_numbers<[1], [0], [0], [1], [0, 0, 1, 1], [], []>} : vector<128x96xbf16>, vector<96x32xbf16>, vector<128x32xf32> -> vector<128x32xf32>
    %61 = arith.addf %49, %60 : vector<128x32xf32>
    %c1_49 = arith.constant 1 : index
    %c0_50 = arith.constant 0 : index
    %c0_51 = arith.constant 0 : index
    %62 = vector.load %arg14[%c1_49, %c0_50, %c0_51] : memref<10x18x32xf32, #tpu.memory_space<vmem>>, vector<8x16x32xf32>
    %63 = arith.truncf %62 : vector<8x16x32xf32> to vector<8x16x32xbf16>
    %c1_52 = arith.constant 1 : index
    %c1_53 = arith.constant 1 : index
    %c0_54 = arith.constant 0 : index
    %64 = vector.load %arg14[%c1_52, %c1_53, %c0_54] : memref<10x18x32xf32, #tpu.memory_space<vmem>>, vector<8x16x32xf32>
    %65 = arith.truncf %64 : vector<8x16x32xf32> to vector<8x16x32xbf16>
    %c1_55 = arith.constant 1 : index
    %c2_56 = arith.constant 2 : index
    %c0_57 = arith.constant 0 : index
    %66 = vector.load %arg14[%c1_55, %c2_56, %c0_57] : memref<10x18x32xf32, #tpu.memory_space<vmem>>, vector<8x16x32xf32>
    %67 = arith.truncf %66 : vector<8x16x32xf32> to vector<8x16x32xbf16>
    %68 = tpu.concatenate %63, %65, %67 in 2 : vector<8x16x32xbf16>, vector<8x16x32xbf16>, vector<8x16x32xbf16> -> vector<8x16x96xbf16>
    %69 = vector.shape_cast %68 : vector<8x16x96xbf16> to vector<128x96xbf16>
    %c1_58 = arith.constant 1 : index
    %c0_59 = arith.constant 0 : index
    %c0_60 = arith.constant 0 : index
    %70 = vector.load %arg7[%c1_58, %c0_59, %c0_60] : memref<3x96x32xbf16, #tpu.memory_space<vmem>>, vector<1x96x32xbf16>
    %71 = vector.shape_cast %70 : vector<1x96x32xbf16> to vector<96x32xbf16>
    %cst_61 = arith.constant dense<0.000000e+00> : vector<128x32xf32>
    %72 = tpu.matmul %69, %71, %cst_61 {dimension_numbers = #tpu.dot_dimension_numbers<[1], [0], [0], [1], [0, 0, 1, 1], [], []>} : vector<128x96xbf16>, vector<96x32xbf16>, vector<128x32xf32> -> vector<128x32xf32>
    %73 = arith.addf %61, %72 : vector<128x32xf32>
    %c2_62 = arith.constant 2 : index
    %c0_63 = arith.constant 0 : index
    %c0_64 = arith.constant 0 : index
    %74 = vector.load %arg14[%c2_62, %c0_63, %c0_64] : memref<10x18x32xf32, #tpu.memory_space<vmem>>, vector<8x16x32xf32>
    %75 = arith.truncf %74 : vector<8x16x32xf32> to vector<8x16x32xbf16>
    %c2_65 = arith.constant 2 : index
    %c1_66 = arith.constant 1 : index
    %c0_67 = arith.constant 0 : index
    %76 = vector.load %arg14[%c2_65, %c1_66, %c0_67] : memref<10x18x32xf32, #tpu.memory_space<vmem>>, vector<8x16x32xf32>
    %77 = arith.truncf %76 : vector<8x16x32xf32> to vector<8x16x32xbf16>
    %c2_68 = arith.constant 2 : index
    %c2_69 = arith.constant 2 : index
    %c0_70 = arith.constant 0 : index
    %78 = vector.load %arg14[%c2_68, %c2_69, %c0_70] : memref<10x18x32xf32, #tpu.memory_space<vmem>>, vector<8x16x32xf32>
    %79 = arith.truncf %78 : vector<8x16x32xf32> to vector<8x16x32xbf16>
    %80 = tpu.concatenate %75, %77, %79 in 2 : vector<8x16x32xbf16>, vector<8x16x32xbf16>, vector<8x16x32xbf16> -> vector<8x16x96xbf16>
    %81 = vector.shape_cast %80 : vector<8x16x96xbf16> to vector<128x96xbf16>
    %c2_71 = arith.constant 2 : index
    %c0_72 = arith.constant 0 : index
    %c0_73 = arith.constant 0 : index
    %82 = vector.load %arg7[%c2_71, %c0_72, %c0_73] : memref<3x96x32xbf16, #tpu.memory_space<vmem>>, vector<1x96x32xbf16>
    %83 = vector.shape_cast %82 : vector<1x96x32xbf16> to vector<96x32xbf16>
    %cst_74 = arith.constant dense<0.000000e+00> : vector<128x32xf32>
    %84 = tpu.matmul %81, %83, %cst_74 {dimension_numbers = #tpu.dot_dimension_numbers<[1], [0], [0], [1], [0, 0, 1, 1], [], []>} : vector<128x96xbf16>, vector<96x32xbf16>, vector<128x32xf32> -> vector<128x32xf32>
    %85 = arith.addf %73, %84 : vector<128x32xf32>
    %c0_75 = arith.constant 0 : index
    %c0_76 = arith.constant 0 : index
    %86 = vector.load %arg8[%c0_75, %c0_76] : memref<1x32xf32, #tpu.memory_space<vmem>>, vector<1x32xf32>
    %87 = vector.broadcast %86 : vector<1x32xf32> to vector<128x32xf32>
    %88 = arith.mulf %85, %87 : vector<128x32xf32>
    %c0_77 = arith.constant 0 : index
    %c0_78 = arith.constant 0 : index
    %89 = vector.load %arg9[%c0_77, %c0_78] : memref<1x32xf32, #tpu.memory_space<vmem>>, vector<1x32xf32>
    %90 = vector.broadcast %89 : vector<1x32xf32> to vector<128x32xf32>
    %91 = arith.addf %88, %90 : vector<128x32xf32>
    %cst_79 = arith.constant 0.000000e+00 : f32
    %92 = vector.broadcast %cst_79 : f32 to vector<128x32xf32>
    %93 = arith.maximumf %91, %92 : vector<128x32xf32>
    %94 = arith.truncf %93 : vector<128x32xf32> to vector<128x32xbf16>
    %c0_80 = arith.constant 0 : index
    %c0_81 = arith.constant 0 : index
    %95 = vector.load %arg10[%c0_80, %c0_81] : memref<32x128xbf16, #tpu.memory_space<vmem>>, vector<32x128xbf16>
    %cst_82 = arith.constant dense<0.000000e+00> : vector<128x128xf32>
    %96 = tpu.matmul %94, %95, %cst_82 {dimension_numbers = #tpu.dot_dimension_numbers<[1], [0], [0], [1], [0, 0, 1, 1], [], []>} : vector<128x32xbf16>, vector<32x128xbf16>, vector<128x128xf32> -> vector<128x128xf32>
    %c0_83 = arith.constant 0 : index
    %c0_84 = arith.constant 0 : index
    %97 = vector.load %arg11[%c0_83, %c0_84] : memref<1x128xf32, #tpu.memory_space<vmem>>, vector<1x128xf32>
    %98 = vector.broadcast %97 : vector<1x128xf32> to vector<128x128xf32>
    %99 = arith.mulf %96, %98 : vector<128x128xf32>
    %c0_85 = arith.constant 0 : index
    %c0_86 = arith.constant 0 : index
    %100 = vector.load %arg12[%c0_85, %c0_86] : memref<1x128xf32, #tpu.memory_space<vmem>>, vector<1x128xf32>
    %101 = vector.broadcast %100 : vector<1x128xf32> to vector<128x128xf32>
    %102 = arith.addf %99, %101 : vector<128x128xf32>
    %c0_87 = arith.constant 0 : index
    %c0_88 = arith.constant 0 : index
    %c0_89 = arith.constant 0 : index
    %c0_90 = arith.constant 0 : index
    %103 = vector.load %arg2[%c0_87, %c0_88, %c0_89, %c0_90] : memref<1x8x16x128xf32, #tpu.memory_space<vmem>>, vector<1x8x16x128xf32>
    %104 = vector.shape_cast %103 : vector<1x8x16x128xf32> to vector<8x16x128xf32>
    %105 = vector.shape_cast %104 : vector<8x16x128xf32> to vector<128x128xf32>
    %106 = arith.addf %102, %105 : vector<128x128xf32>
    %cst_91 = arith.constant 0.000000e+00 : f32
    %107 = vector.broadcast %cst_91 : f32 to vector<128x128xf32>
    %108 = arith.maximumf %106, %107 : vector<128x128xf32>
    %109 = vector.shape_cast %108 : vector<128x128xf32> to vector<8x16x128xf32>
    %c0_92 = arith.constant 0 : index
    %c0_93 = arith.constant 0 : index
    %c0_94 = arith.constant 0 : index
    %c0_95 = arith.constant 0 : index
    %110 = vector.load %arg13[%c0_92, %c0_93, %c0_94, %c0_95] : memref<1x8x16x128xf32, #tpu.memory_space<vmem>>, vector<1x8x16x128xf32>
    %111 = vector.shape_cast %110 : vector<1x8x16x128xf32> to vector<8x16x128xf32>
    %112 = vector.shape_cast %109 : vector<8x16x128xf32> to vector<1x8x16x128xf32>
    tpu.vector_store %arg13[%c0_92, %c0_93, %c0_94, %c0_95], %112 {strides = array<i32>} : memref<1x8x16x128xf32, #tpu.memory_space<vmem>>, vector<1x8x16x128xf32>,
    return
  }
  func.func @transform_0(%arg0: i32, %arg1: i32) -> (i32, i32, i32, i32) {
    %c0_i32 = arith.constant 0 : i32
    %c0_i32_0 = arith.constant 0 : i32
    %c0_i32_1 = arith.constant 0 : i32
    return %arg0, %arg1, %c0_i32, %c0_i32_0 : i32, i32, i32, i32
  }
  func.func @transform_1(%arg0: i32, %arg1: i32) -> (i32, i32, i32, i32, i32) {
    %c0_i32 = arith.constant 0 : i32
    %c0_i32_0 = arith.constant 0 : i32
    %c0_i32_1 = arith.constant 0 : i32
    %c0_i32_2 = arith.constant 0 : i32
    return %arg0, %arg1, %c0_i32, %c0_i32_0, %c0_i32_1 : i32, i32, i32, i32, i32
  }
  func.func @transform_2(%arg0: i32, %arg1: i32) -> (i32, i32) {
    %c0_i32 = arith.constant 0 : i32
    %c0_i32_0 = arith.constant 0 : i32
    %c0_i32_1 = arith.constant 0 : i32
    return %c0_i32, %c0_i32_0 : i32, i32
  }
  func.func @transform_3(%arg0: i32, %arg1: i32) -> (i32, i32) {
    %c0_i32 = arith.constant 0 : i32
    %c0_i32_0 = arith.constant 0 : i32
    %c0_i32_1 = arith.constant 0 : i32
    return %c0_i32, %c0_i32_0 : i32, i32
  }
  func.func @transform_4(%arg0: i32, %arg1: i32) -> (i32, i32) {
    %c0_i32 = arith.constant 0 : i32
    %c0_i32_0 = arith.constant 0 : i32
    %c0_i32_1 = arith.constant 0 : i32
    return %c0_i32, %c0_i32_0 : i32, i32
  }
  func.func @transform_5(%arg0: i32, %arg1: i32) -> (i32, i32, i32) {
    %c0_i32 = arith.constant 0 : i32
    %c0_i32_0 = arith.constant 0 : i32
    %c0_i32_1 = arith.constant 0 : i32
    %c0_i32_2 = arith.constant 0 : i32
    return %c0_i32, %c0_i32_0, %c0_i32_1 : i32, i32, i32
  }
  func.func @transform_6(%arg0: i32, %arg1: i32) -> (i32, i32) {
    %c0_i32 = arith.constant 0 : i32
    %c0_i32_0 = arith.constant 0 : i32
    %c0_i32_1 = arith.constant 0 : i32
    return %c0_i32, %c0_i32_0 : i32, i32
  }
  func.func @transform_7(%arg0: i32, %arg1: i32) -> (i32, i32) {
    %c0_i32 = arith.constant 0 : i32
    %c0_i32_0 = arith.constant 0 : i32
    %c0_i32_1 = arith.constant 0 : i32
    return %c0_i32, %c0_i32_0 : i32, i32
  }
  func.func @transform_8(%arg0: i32, %arg1: i32) -> (i32, i32) {
    %c0_i32 = arith.constant 0 : i32
    %c0_i32_0 = arith.constant 0 : i32
    %c0_i32_1 = arith.constant 0 : i32
    return %c0_i32, %c0_i32_0 : i32, i32
  }
  func.func @transform_9(%arg0: i32, %arg1: i32) -> (i32, i32) {
    %c0_i32 = arith.constant 0 : i32
    %c0_i32_0 = arith.constant 0 : i32
    %c0_i32_1 = arith.constant 0 : i32
    return %c0_i32, %c0_i32_0 : i32, i32
  }
  func.func @transform_10(%arg0: i32, %arg1: i32) -> (i32, i32) {
    %c0_i32 = arith.constant 0 : i32
    %c0_i32_0 = arith.constant 0 : i32
    %c0_i32_1 = arith.constant 0 : i32
    return %c0_i32, %c0_i32_0 : i32, i32
  }
  func.func @transform_11(%arg0: i32, %arg1: i32) -> (i32, i32, i32, i32) {
    %c0_i32 = arith.constant 0 : i32
    %c0_i32_0 = arith.constant 0 : i32
    %c0_i32_1 = arith.constant 0 : i32
    return %arg0, %arg1, %c0_i32, %c0_i32_0 : i32, i32, i32, i32
  }
}

</mosaic_0001>

<llo_original>
// kernel: tpu_custom_call.1
$region0: #{tpu_custom_call.1}
  #allocation0 [shape = 'u32[]', space=smem, size = 0x4, offset = 0x4, fixed_abs, tag = 'smem constant byte address 0x4 - core index']
  #allocation1 [shape = 'u32[144,128]{1,0:T(1,128)}', space=vmem, size = 0x12000, scoped, tag = 'internal scratch']
  #allocation2 [shape = 'f32[10,18,32]{2,1,0:T(8,128)}', space=vmem, size = 0x1e000, scoped, tag = 'scratch operand']
  %s0 = inlined_call_operand.hbm [shape: f32[2,16,16,128], index: 0, kind: input, shape index: {}]
  %s1 = inlined_call_operand.vmem [shape: f32[2,2,2,16,128], index: 1, kind: input, shape index: {}]
  %s2 = inlined_call_operand.vmem [shape: bf16[128,32], index: 2, kind: input, shape index: {}]
  %s3 = inlined_call_operand.vmem [shape: f32[1,32], index: 3, kind: input, shape index: {}]
  %s4 = inlined_call_operand.vmem [shape: f32[1,32], index: 4, kind: input, shape index: {}]
  %s5 = inlined_call_operand.vmem [shape: bf16[3,96,32], index: 5, kind: input, shape index: {}]
  %s6 = inlined_call_operand.vmem [shape: f32[1,32], index: 6, kind: input, shape index: {}]
  %s7 = inlined_call_operand.vmem [shape: f32[1,32], index: 7, kind: input, shape index: {}]
  %s8 = inlined_call_operand.vmem [shape: bf16[32,128], index: 8, kind: input, shape index: {}]
  %s9 = inlined_call_operand.vmem [shape: f32[1,128], index: 9, kind: input, shape index: {}]
  %s10 = inlined_call_operand.vmem [shape: f32[1,128], index: 10, kind: input, shape index: {}]
  %s11 = inlined_call_operand.hbm [shape: f32[2,16,16,128], index: 11, kind: output, shape index: {}]
  %s12 = sld [smem:[#allocation0]]
  $region81: #{tpu_custom_call.1} parent=0
    _
  %s14 = ssub.s32 1, %s12
  %s15 = scalar_select 0, %s14, %s12
  $region1: #{tpu_custom_call.1} parent=0
    #allocation3 [shape = 'u8[131072]{0}', space=vmem, size = 0x20000, scoped, tag = 'input window, operand 0']
    #allocation4 [shape = 's32[2]{0}', space=sflag, size = 0x8, scoped, tag = 'scoped memory for tpu_custom_call.1']
    #allocation5 [shape = 's32[2]{0}', space=sflag, size = 0x8, scoped, tag = 'scoped memory for tpu_custom_call.1']
    #allocation6 [shape = 'u8[131072]{0}', space=vmem, size = 0x20000, scoped, tag = 'output window, operand 0']
    %16 = vsyncpa [#allocation4], 0
    %s17 = scalar_lea.sflag [#allocation4], 1
    %18 = vsyncpa %s17, 0
    %19 = vsyncpa [#allocation5], 0
    %s20 = scalar_lea.sflag [#allocation5], 1
    %21 = vsyncpa %s20, 0
    loop: start=0, step=1, limit=6
    $region2: #{tpu_custom_call.1} parent=1 // loop_pre_header
      _
    $region3: #{tpu_custom_call.1} parent=1 // loop_header
      %s23 = sphi 0, %s27
      %p24 = scmp.ge.s32.totalorder %s23, 6
      %s30 = sphi 0, %s42
      %s31 = sphi 0, %s38
      %s32 = sphi 0, %s30
      %s33 = sphi 0, %s31
      %s34 = sphi 0, %s32
      %s35 = sphi 0, %s33
      %s47 = sphi 0, %s49
      %s50 = sphi 0, %s47
      %s51 = sphi 0, %s50
      %s67 = sphi 0, %s51
      %s75 = sphi 0, %s77
      %s78 = sphi 0, %s75
      %s79 = sphi 0, %s78
      %s95 = sphi 0, %s79
      %s99 = sphi 0, %s99
      %s101 = sphi 0, %s99
      %s102 = sphi 0, %s101
      %s116 = sphi 0, %s102
      %s120 = sphi 0, %s120
      %s122 = sphi 0, %s120
      %s123 = sphi 0, %s122
      %s137 = sphi 0, %s123
      %s141 = sphi 0, %s141
      %s143 = sphi 0, %s141
      %s144 = sphi 0, %s143
      %s158 = sphi 0, %s144
      %s162 = sphi 0, %s162
      %s164 = sphi 0, %s162
      %s165 = sphi 0, %s164
      %s179 = sphi 0, %s165
      %s183 = sphi 0, %s183
      %s185 = sphi 0, %s183
      %s186 = sphi 0, %s185
      %s200 = sphi 0, %s186
      %s204 = sphi 0, %s204
      %s206 = sphi 0, %s204
      %s207 = sphi 0, %s206
      %s221 = sphi 0, %s207
      %s225 = sphi 0, %s225
      %s227 = sphi 0, %s225
      %s228 = sphi 0, %s227
      %s242 = sphi 0, %s228
      %s246 = sphi 0, %s246
      %s248 = sphi 0, %s246
      %s249 = sphi 0, %s248
      %s263 = sphi 0, %s249
      %s267 = sphi 0, %s267
      %s269 = sphi 0, %s267
      %s270 = sphi 0, %s269
      %s284 = sphi 0, %s270
      %s292 = sphi 0, %s294
      %s295 = sphi 0, %s292
      %s296 = sphi 0, %s295
      %s312 = sphi 0, %s296
    $region4: #{tpu_custom_call.1} parent=1 // loop_header_branch
      %26 = sbr.rel (%p24) target = $region8
    $region5: #{tpu_custom_call.1} parent=1 // loop_body
      %s28 = ssub.s32 %s23, 1
      %s29 = ssub.s32 %s23, 2
      %s36 = sadd.s32 1, %s31
      %p37 = scmp.ge.s32.totalorder %s36, 2
      %s38 = scalar_select %p37, 0, %s36
      %s39 = sadd.s32 1, %s30
      %s40 = scalar_select %p37, %s39, %s30
      %p41 = scmp.ge.s32.totalorder %s40, 2
      %s42 = scalar_select %p41, 0, %s40
      %s43 = ssub.s32 %s30, %s42
      %s44 = ssub.s32 %s31, %s38
      %s45 = sor.u32 %s43, %s44
      %p46 = scmp.eq.s32.totalorder %s45, 0
      %s48 = sadd.s32 %s47, 1
      %s49 = scalar_select %p46, %s47, %s48
      %p52 = pneg %p46
      %p53 = scmp.eq.s32.totalorder %s23, 3
      %p54 = por %p52, %p53
      %p55 = scmp.ne.s32.totalorder %s47, %s50
      %p56 = scmp.eq.s32.totalorder %s23, 0
      %p57 = por %p55, %p56
      %p58 = scmp.ne.s32.totalorder %s47, %s50
      %p59 = scmp.eq.s32.totalorder %s28, 3
      %p60 = por %p58, %p59
      %p61 = scmp.ne.s32.totalorder %s50, %s51
      %p62 = scmp.eq.s32.totalorder %s28, 0
      %p63 = por %p61, %p62
      %p64 = scmp.ne.s32.totalorder %s50, %s51
      %p65 = scmp.eq.s32.totalorder %s29, 3
      %p66 = por %p64, %p65
      %p68 = scmp.ne.s32.totalorder %s51, %s67
      %p69 = scmp.eq.s32.totalorder %s29, 0
      %p70 = por %p68, %p69
      %s71 = ssub.s32 %s30, %s42
      %s72 = ssub.s32 %s31, %s38
      %s73 = sor.u32 %s71, %s72
      %p74 = scmp.eq.s32.totalorder %s73, 0
      %s76 = sadd.s32 %s75, 1
      %s77 = scalar_select %p74, %s75, %s76
      %p80 = pneg %p74
      %p81 = scmp.eq.s32.totalorder %s23, 3
      %p82 = por %p80, %p81
      %p83 = scmp.ne.s32.totalorder %s75, %s78
      %p84 = scmp.eq.s32.totalorder %s23, 0
      %p85 = por %p83, %p84
      %p86 = scmp.ne.s32.totalorder %s75, %s78
      %p87 = scmp.eq.s32.totalorder %s28, 3
      %p88 = por %p86, %p87
      %p89 = scmp.ne.s32.totalorder %s78, %s79
      %p90 = scmp.eq.s32.totalorder %s28, 0
      %p91 = por %p89, %p90
      %p92 = scmp.ne.s32.totalorder %s78, %s79
      %p93 = scmp.eq.s32.totalorder %s29, 3
      %p94 = por %p92, %p93
      %p96 = scmp.ne.s32.totalorder %s79, %s95
      %p97 = scmp.eq.s32.totalorder %s29, 0
      %p98 = por %p96, %p97
      %s100 = sadd.s32 %s99, 1
      %p103 = scmp.eq.s32.totalorder %s23, 3
      %p104 = scmp.ne.s32.totalorder %s99, %s101
      %p105 = scmp.eq.s32.totalorder %s23, 0
      %p106 = por %p104, %p105
      %p107 = scmp.ne.s32.totalorder %s99, %s101
      %p108 = scmp.eq.s32.totalorder %s28, 3
      %p109 = por %p107, %p108
      %p110 = scmp.ne.s32.totalorder %s101, %s102
      %p111 = scmp.eq.s32.totalorder %s28, 0
      %p112 = por %p110, %p111
      %p113 = scmp.ne.s32.totalorder %s101, %s102
      %p114 = scmp.eq.s32.totalorder %s29, 3
      %p115 = por %p113, %p114
      %p117 = scmp.ne.s32.totalorder %s102, %s116
      %p118 = scmp.eq.s32.totalorder %s29, 0
      %p119 = por %p117, %p118
      %s121 = sadd.s32 %s120, 1
      %p124 = scmp.eq.s32.totalorder %s23, 3
      %p125 = scmp.ne.s32.totalorder %s120, %s122
      %p126 = scmp.eq.s32.totalorder %s23, 0
      %p127 = por %p125, %p126
      %p128 = scmp.ne.s32.totalorder %s120, %s122
      %p129 = scmp.eq.s32.totalorder %s28, 3
      %p130 = por %p128, %p129
      %p131 = scmp.ne.s32.totalorder %s122, %s123
      %p132 = scmp.eq.s32.totalorder %s28, 0
      %p133 = por %p131, %p132
      %p134 = scmp.ne.s32.totalorder %s122, %s123
      %p135 = scmp.eq.s32.totalorder %s29, 3
      %p136 = por %p134, %p135
      %p138 = scmp.ne.s32.totalorder %s123, %s137
      %p139 = scmp.eq.s32.totalorder %s29, 0
      %p140 = por %p138, %p139
      %s142 = sadd.s32 %s141, 1
      %p145 = scmp.eq.s32.totalorder %s23, 3
      %p146 = scmp.ne.s32.totalorder %s141, %s143
      %p147 = scmp.eq.s32.totalorder %s23, 0
      %p148 = por %p146, %p147
      %p149 = scmp.ne.s32.totalorder %s141, %s143
      %p150 = scmp.eq.s32.totalorder %s28, 3
      %p151 = por %p149, %p150
      %p152 = scmp.ne.s32.totalorder %s143, %s144
      %p153 = scmp.eq.s32.totalorder %s28, 0
      %p154 = por %p152, %p153
      %p155 = scmp.ne.s32.totalorder %s143, %s144
      %p156 = scmp.eq.s32.totalorder %s29, 3
      %p157 = por %p155, %p156
      %p159 = scmp.ne.s32.totalorder %s144, %s158
      %p160 = scmp.eq.s32.totalorder %s29, 0
      %p161 = por %p159, %p160
      %s163 = sadd.s32 %s162, 1
      %p166 = scmp.eq.s32.totalorder %s23, 3
      %p167 = scmp.ne.s32.totalorder %s162, %s164
      %p168 = scmp.eq.s32.totalorder %s23, 0
      %p169 = por %p167, %p168
      %p170 = scmp.ne.s32.totalorder %s162, %s164
      %p171 = scmp.eq.s32.totalorder %s28, 3
      %p172 = por %p170, %p171
      %p173 = scmp.ne.s32.totalorder %s164, %s165
      %p174 = scmp.eq.s32.totalorder %s28, 0
      %p175 = por %p173, %p174
      %p176 = scmp.ne.s32.totalorder %s164, %s165
      %p177 = scmp.eq.s32.totalorder %s29, 3
      %p178 = por %p176, %p177
      %p180 = scmp.ne.s32.totalorder %s165, %s179
      %p181 = scmp.eq.s32.totalorder %s29, 0
      %p182 = por %p180, %p181
      %s184 = sadd.s32 %s183, 1
      %p187 = scmp.eq.s32.totalorder %s23, 3
      %p188 = scmp.ne.s32.totalorder %s183, %s185
      %p189 = scmp.eq.s32.totalorder %s23, 0
      %p190 = por %p188, %p189
      %p191 = scmp.ne.s32.totalorder %s183, %s185
      %p192 = scmp.eq.s32.totalorder %s28, 3
      %p193 = por %p191, %p192
      %p194 = scmp.ne.s32.totalorder %s185, %s186
      %p195 = scmp.eq.s32.totalorder %s28, 0
      %p196 = por %p194, %p195
      %p197 = scmp.ne.s32.totalorder %s185, %s186
      %p198 = scmp.eq.s32.totalorder %s29, 3
      %p199 = por %p197, %p198
      %p201 = scmp.ne.s32.totalorder %s186, %s200
      %p202 = scmp.eq.s32.totalorder %s29, 0
      %p203 = por %p201, %p202
      %s205 = sadd.s32 %s204, 1
      %p208 = scmp.eq.s32.totalorder %s23, 3
      %p209 = scmp.ne.s32.totalorder %s204, %s206
      %p210 = scmp.eq.s32.totalorder %s23, 0
      %p211 = por %p209, %p210
      %p212 = scmp.ne.s32.totalorder %s204, %s206
      %p213 = scmp.eq.s32.totalorder %s28, 3
      %p214 = por %p212, %p213
      %p215 = scmp.ne.s32.totalorder %s206, %s207
      %p216 = scmp.eq.s32.totalorder %s28, 0
      %p217 = por %p215, %p216
      %p218 = scmp.ne.s32.totalorder %s206, %s207
      %p219 = scmp.eq.s32.totalorder %s29, 3
      %p220 = por %p218, %p219
      %p222 = scmp.ne.s32.totalorder %s207, %s221
      %p223 = scmp.eq.s32.totalorder %s29, 0
      %p224 = por %p222, %p223
      %s226 = sadd.s32 %s225, 1
      %p229 = scmp.eq.s32.totalorder %s23, 3
      %p230 = scmp.ne.s32.totalorder %s225, %s227
      %p231 = scmp.eq.s32.totalorder %s23, 0
      %p232 = por %p230, %p231
      %p233 = scmp.ne.s32.totalorder %s225, %s227
      %p234 = scmp.eq.s32.totalorder %s28, 3
      %p235 = por %p233, %p234
      %p236 = scmp.ne.s32.totalorder %s227, %s228
      %p237 = scmp.eq.s32.totalorder %s28, 0
      %p238 = por %p236, %p237
      %p239 = scmp.ne.s32.totalorder %s227, %s228
      %p240 = scmp.eq.s32.totalorder %s29, 3
      %p241 = por %p239, %p240
      %p243 = scmp.ne.s32.totalorder %s228, %s242
      %p244 = scmp.eq.s32.totalorder %s29, 0
      %p245 = por %p243, %p244
      %s247 = sadd.s32 %s246, 1
      %p250 = scmp.eq.s32.totalorder %s23, 3
      %p251 = scmp.ne.s32.totalorder %s246, %s248
      %p252 = scmp.eq.s32.totalorder %s23, 0
      %p253 = por %p251, %p252
      %p254 = scmp.ne.s32.totalorder %s246, %s248
      %p255 = scmp.eq.s32.totalorder %s28, 3
      %p256 = por %p254, %p255
      %p257 = scmp.ne.s32.totalorder %s248, %s249
      %p258 = scmp.eq.s32.totalorder %s28, 0
      %p259 = por %p257, %p258
      %p260 = scmp.ne.s32.totalorder %s248, %s249
      %p261 = scmp.eq.s32.totalorder %s29, 3
      %p262 = por %p260, %p261
      %p264 = scmp.ne.s32.totalorder %s249, %s263
      %p265 = scmp.eq.s32.totalorder %s29, 0
      %p266 = por %p264, %p265
      %s268 = sadd.s32 %s267, 1
      %p271 = scmp.eq.s32.totalorder %s23, 3
      %p272 = scmp.ne.s32.totalorder %s267, %s269
      %p273 = scmp.eq.s32.totalorder %s23, 0
      %p274 = por %p272, %p273
      %p275 = scmp.ne.s32.totalorder %s267, %s269
      %p276 = scmp.eq.s32.totalorder %s28, 3
      %p277 = por %p275, %p276
      %p278 = scmp.ne.s32.totalorder %s269, %s270
      %p279 = scmp.eq.s32.totalorder %s28, 0
      %p280 = por %p278, %p279
      %p281 = scmp.ne.s32.totalorder %s269, %s270
      %p282 = scmp.eq.s32.totalorder %s29, 3
      %p283 = por %p281, %p282
      %p285 = scmp.ne.s32.totalorder %s270, %s284
      %p286 = scmp.eq.s32.totalorder %s29, 0
      %p287 = por %p285, %p286
      %s288 = ssub.s32 %s30, %s42
      %s289 = ssub.s32 %s31, %s38
      %s290 = sor.u32 %s288, %s289
      %p291 = scmp.eq.s32.totalorder %s290, 0
      %s293 = sadd.s32 %s292, 1
      %s294 = scalar_select %p291, %s292, %s293
      %p297 = pneg %p291
      %p298 = scmp.eq.s32.totalorder %s23, 3
      %p299 = por %p297, %p298
      %p300 = scmp.ne.s32.totalorder %s292, %s295
      %p301 = scmp.eq.s32.totalorder %s23, 0
      %p302 = por %p300, %p301
      %p303 = scmp.ne.s32.totalorder %s292, %s295
      %p304 = scmp.eq.s32.totalorder %s28, 3
      %p305 = por %p303, %p304
      %p306 = scmp.ne.s32.totalorder %s295, %s296
      %p307 = scmp.eq.s32.totalorder %s28, 0
      %p308 = por %p306, %p307
      %p309 = scmp.ne.s32.totalorder %s295, %s296
      %p310 = scmp.eq.s32.totalorder %s29, 3
      %p311 = por %p309, %p310
      %p313 = scmp.ne.s32.totalorder %s296, %s312
      %p314 = scmp.eq.s32.totalorder %s29, 0
      %p315 = por %p313, %p314
      %p316 = scmp.le.s32.totalorder 1, %s23
      %p317 = scmp.lt.s32.totalorder %s23, 5
      %p318 = pnand %p316, %p317
      %p319 = pneg %p318
      // Predicated region
      $region9: #{tpu_custom_call.1} parent=5 // pred_check
        _
      $region10: #{tpu_custom_call.1} parent=5 // pred_check_branch
        %321 = sbr.rel (%p318) target = $region12
      $region11: #{tpu_custom_call.1} parent=5 // pred_region
        %s322 = ssub.s32 %s23, 1
        // Predicated region
        $region13: #{tpu_custom_call.1} parent=11 // pred_check
          %p323 = pneg %p112
        $region14: #{tpu_custom_call.1} parent=11 // pred_check_branch
          %325 = sbr.rel (%p323) target = $region16
        $region15: #{tpu_custom_call.1} parent=11 // pred_region
          _
        $region16: #{tpu_custom_call.1} parent=11 // pred_fallthru
          _
        // Predicated region
        $region17: #{tpu_custom_call.1} parent=11 // pred_check
          %p326 = pneg %p133
        $region18: #{tpu_custom_call.1} parent=11 // pred_check_branch
          %328 = sbr.rel (%p326) target = $region20
        $region19: #{tpu_custom_call.1} parent=11 // pred_region
          _
        $region20: #{tpu_custom_call.1} parent=11 // pred_fallthru
          _
        // Predicated region
        $region21: #{tpu_custom_call.1} parent=11 // pred_check
          %p329 = pneg %p154
        $region22: #{tpu_custom_call.1} parent=11 // pred_check_branch
          %331 = sbr.rel (%p329) target = $region24
        $region23: #{tpu_custom_call.1} parent=11 // pred_region
          _
        $region24: #{tpu_custom_call.1} parent=11 // pred_fallthru
          _
        // Predicated region
        $region25: #{tpu_custom_call.1} parent=11 // pred_check
          %p332 = pneg %p175
        $region26: #{tpu_custom_call.1} parent=11 // pred_check_branch
          %334 = sbr.rel (%p332) target = $region28
        $region27: #{tpu_custom_call.1} parent=11 // pred_region
          _
        $region28: #{tpu_custom_call.1} parent=11 // pred_fallthru
          _
        // Predicated region
        $region29: #{tpu_custom_call.1} parent=11 // pred_check
          %p335 = pneg %p196
        $region30: #{tpu_custom_call.1} parent=11 // pred_check_branch
          %337 = sbr.rel (%p335) target = $region32
        $region31: #{tpu_custom_call.1} parent=11 // pred_region
          _
        $region32: #{tpu_custom_call.1} parent=11 // pred_fallthru
          _
        // Predicated region
        $region33: #{tpu_custom_call.1} parent=11 // pred_check
          %p338 = pneg %p217
        $region34: #{tpu_custom_call.1} parent=11 // pred_check_branch
          %340 = sbr.rel (%p338) target = $region36
        $region35: #{tpu_custom_call.1} parent=11 // pred_region
          _
        $region36: #{tpu_custom_call.1} parent=11 // pred_fallthru
          _
        // Predicated region
        $region37: #{tpu_custom_call.1} parent=11 // pred_check
          %p341 = pneg %p238
        $region38: #{tpu_custom_call.1} parent=11 // pred_check_branch
          %343 = sbr.rel (%p341) target = $region40
        $region39: #{tpu_custom_call.1} parent=11 // pred_region
          _
        $region40: #{tpu_custom_call.1} parent=11 // pred_fallthru
          _
        // Predicated region
        $region41: #{tpu_custom_call.1} parent=11 // pred_check
          %p344 = pneg %p259
        $region42: #{tpu_custom_call.1} parent=11 // pred_check_branch
          %346 = sbr.rel (%p344) target = $region44
        $region43: #{tpu_custom_call.1} parent=11 // pred_region
          _
        $region44: #{tpu_custom_call.1} parent=11 // pred_fallthru
          _
        // Predicated region
        $region45: #{tpu_custom_call.1} parent=11 // pred_check
          %p347 = pneg %p280
        $region46: #{tpu_custom_call.1} parent=11 // pred_check_branch
          %349 = sbr.rel (%p347) target = $region48
        $region47: #{tpu_custom_call.1} parent=11 // pred_region
          _
        $region48: #{tpu_custom_call.1} parent=11 // pred_fallthru
          _
      $region12: #{tpu_custom_call.1} parent=5 // pred_fallthru
        _
      %p350 = scmp.lt.s32.totalorder %s23, 4
      // Predicated region
      $region49: #{tpu_custom_call.1} parent=5 // pred_check
        %p351 = pneg %p350
      $region50: #{tpu_custom_call.1} parent=5 // pred_check_branch
        %353 = sbr.rel (%p351) target = $region52
      $region51: #{tpu_custom_call.1} parent=5 // pred_region
        // Predicated region
        $region53: #{tpu_custom_call.1} parent=51 // pred_check
          %p354 = pneg %p57
        $region54: #{tpu_custom_call.1} parent=51 // pred_check_branch
          %356 = sbr.rel (%p354) target = $region56
        $region55: #{tpu_custom_call.1} parent=51 // pred_region
          %s357 = sand.u32 %s47, 1
          %s358 = scalar_lea.sflag [#allocation4], %s357
          %s359 = sand.u32 %s47, 1
          %s360 = smul.addr %s359, 128
          %s361 = scalar_lea.vmem [#allocation3], %s360
          %s362 = smul.u32 8, %s31
          %s364 = ssub.s32 2048, 2048
          %365 = vsyncadd %s358, %s364
          %s366 = smul.addr %s362, 2
          %s367 = smul.addr %s30, 32
          %s368 = sadd.s32 %s366, %s367
          %s369 = smul.addr %s368, 128
          %s370 = scalar_lea.hbm %s0, %s369
          %s371 = sshll.u32 %s361, 4
          %s372 = int_to_ptr.vmem [resolvable:$true] %s371
          %377 = dma.hbm_to_vmem [thread:$0]  %s370, 2048, %s372, %s358, 128, 128, 8
        $region56: #{tpu_custom_call.1} parent=51 // pred_fallthru
          _
        // Predicated region
        $region57: #{tpu_custom_call.1} parent=51 // pred_check
          %p378 = pneg %p85
        $region58: #{tpu_custom_call.1} parent=51 // pred_check_branch
          %380 = sbr.rel (%p378) target = $region60
        $region59: #{tpu_custom_call.1} parent=51 // pred_region
          %p381 = scmp.lt.s32.totalorder %s30, 1
          %s382 = scalar_select %p381, %s30, 1
          %p383 = scmp.lt.s32.totalorder %s31, 1
          %s384 = scalar_select %p383, %s31, 1
          %s385 = smul.addr %s384, 4
          %s386 = smul.addr %s382, 8
          %s387 = sadd.s32 %s385, %s386
          %s388 = smul.addr %s387, 8
          %s389 = scalar_lea.vmem %s1, %s388
        $region60: #{tpu_custom_call.1} parent=51 // pred_fallthru
          _
      $region52: #{tpu_custom_call.1} parent=5 // pred_fallthru
        _
      %p390 = scmp.le.s32.totalorder 1, %s23
      %p391 = scmp.lt.s32.totalorder %s23, 5
      %p392 = pnand %p390, %p391
      %p393 = pneg %p392
      // Predicated region
      $region61: #{tpu_custom_call.1} parent=5 // pred_check
        _
      $region62: #{tpu_custom_call.1} parent=5 // pred_check_branch
        %395 = sbr.rel (%p392) target = $region64
      $region63: #{tpu_custom_call.1} parent=5 // pred_region
        %s396 = ssub.s32 %s23, 1
        %s397 = sand.u32 %s50, 1
        %s398 = scalar_lea.sflag [#allocation4], %s397
        %s399 = sand.u32 %s50, 1
        %s400 = smul.addr %s399, 128
        %s401 = scalar_lea.vmem [#allocation3], %s400
        // Predicated region
        $region65: #{tpu_custom_call.1} parent=63 // pred_check
          %p402 = pneg %p63
        $region66: #{tpu_custom_call.1} parent=63 // pred_check_branch
          %404 = sbr.rel (%p402) target = $region68
        $region67: #{tpu_custom_call.1} parent=63 // pred_region
          %405 = dma.done %s398, 2048
        $region68: #{tpu_custom_call.1} parent=63 // pred_fallthru
          _
        %s406 = sand.u32 %s50, 1
        %s407 = scalar_lea.sflag [#allocation4], %s406
        %s408 = sand.u32 %s50, 1
        %s409 = smul.addr %s408, 128
        %s410 = scalar_lea.vmem [#allocation3], %s409
        %p411 = pneg %p63
        %p412 = pneg %p60
        %p413 = scmp.lt.s32.totalorder %s32, 1
        %s414 = scalar_select %p413, %s32, 1
        %p415 = scmp.lt.s32.totalorder %s33, 1
        %s416 = scalar_select %p415, %s33, 1
        %s417 = smul.addr %s416, 4
        %s418 = smul.addr %s414, 8
        %s419 = sadd.s32 %s417, %s418
        %s420 = smul.addr %s419, 8
        %s421 = scalar_lea.vmem %s1, %s420
        %p422 = pneg %p91
        %p423 = pneg %p88
        %p424 = pneg %p112
        %p425 = pneg %p109
        %p426 = pneg %p133
        %p427 = pneg %p130
        %p428 = pneg %p154
        %p429 = pneg %p151
        %p430 = pneg %p175
        %p431 = pneg %p172
        %p432 = pneg %p196
        %p433 = pneg %p193
        %p434 = pneg %p217
        %p435 = pneg %p214
        %p436 = pneg %p238
        %p437 = pneg %p235
        %p438 = pneg %p259
        %p439 = pneg %p256
        %p440 = pneg %p280
        %p441 = pneg %p277
        %p442 = pneg %p308
        %p443 = pneg %p305
        %s444 = sand.u32 %s295, 1
        %s445 = scalar_lea.sflag [#allocation5], %s444
        %s446 = sand.u32 %s295, 1
        %s447 = smul.addr %s446, 128
        %s448 = scalar_lea.vmem [#allocation6], %s447
        %s449 = smul.u32 8, %s33
        %p450 = scmp.lt.s32.totalorder %s32, 1
        %s451 = scalar_select %p450, %s32, 1
        %p452 = scmp.lt.s32.totalorder %s33, 1
        %s453 = scalar_select %p452, %s33, 1
        %s454 = smul.addr %s453, 4
        %s455 = smul.addr %s451, 8
        %s456 = sadd.s32 %s454, %s455
        %s457 = smul.addr %s456, 8
        %s458 = scalar_lea.vmem %s1, %s457
        %s459 = smul.u32 8, %s33
        %v461 = vld [vmem:[%s401] sm:$0xff]
        %v462 = vld [vmem:[%s401 + $0x8] sm:$0xff]
        %v463 = vld [vmem:[%s401 + $0x10] sm:$0xff]
        %v464 = vld [vmem:[%s401 + $0x18] sm:$0xff]
        %v465 = vld [vmem:[%s401 + $0x20] sm:$0xff]
        %v466 = vld [vmem:[%s401 + $0x28] sm:$0xff]
        %v467 = vld [vmem:[%s401 + $0x30] sm:$0xff]
        %v468 = vld [vmem:[%s401 + $0x38] sm:$0xff]
        %v469 = vld [vmem:[%s401 + $0x40] sm:$0xff]
        %v470 = vld [vmem:[%s401 + $0x48] sm:$0xff]
        %v471 = vld [vmem:[%s401 + $0x50] sm:$0xff]
        %v472 = vld [vmem:[%s401 + $0x58] sm:$0xff]
        %v473 = vld [vmem:[%s401 + $0x60] sm:$0xff]
        %v474 = vld [vmem:[%s401 + $0x68] sm:$0xff]
        %v475 = vld [vmem:[%s401 + $0x70] sm:$0xff]
        %v476 = vld [vmem:[%s401 + $0x78] sm:$0xff]
        %v477 = vpack.c.bf16 %v462, %v461
        %v478 = vpack.c.bf16 %v464, %v463
        %v479 = vpack.c.bf16 %v466, %v465
        %v480 = vpack.c.bf16 %v468, %v467
        %v481 = vpack.c.bf16 %v470, %v469
        %v482 = vpack.c.bf16 %v472, %v471
        %v483 = vpack.c.bf16 %v474, %v473
        %v484 = vpack.c.bf16 %v476, %v475
        %v485 = vld [vmem:[%s2] sm:$0xf]
        %v486 = vld [vmem:[%s2 + $0x4] sm:$0xf]
        %v487 = vld [vmem:[%s2 + $0x8] sm:$0xf]
        %v488 = vld [vmem:[%s2 + $0xc] sm:$0xf]
        %v489 = vld [vmem:[%s2 + $0x10] sm:$0xf]
        %v490 = vld [vmem:[%s2 + $0x14] sm:$0xf]
        %v491 = vld [vmem:[%s2 + $0x18] sm:$0xf]
        %v492 = vld [vmem:[%s2 + $0x1c] sm:$0xf]
        %v493 = vld [vmem:[%s2 + $0x20] sm:$0xf]
        %v494 = vld [vmem:[%s2 + $0x24] sm:$0xf]
        %v495 = vld [vmem:[%s2 + $0x28] sm:$0xf]
        %v496 = vld [vmem:[%s2 + $0x2c] sm:$0xf]
        %v497 = vld [vmem:[%s2 + $0x30] sm:$0xf]
        %v498 = vld [vmem:[%s2 + $0x34] sm:$0xf]
        %v499 = vld [vmem:[%s2 + $0x38] sm:$0xf]
        %v500 = vld [vmem:[%s2 + $0x3c] sm:$0xf]
        %v517 = vunpack.c.l.b16 %v485
        %v518 = vunpack.c.l.b16 %v486
        %v519 = vunpack.c.l.b16 %v487
        %v520 = vunpack.c.l.b16 %v488
        %v521 = vunpack.c.l.b16 %v489
        %v522 = vunpack.c.l.b16 %v490
        %v523 = vunpack.c.l.b16 %v491
        %v524 = vunpack.c.l.b16 %v492
        %v525 = vunpack.c.l.b16 %v493
        %v526 = vunpack.c.l.b16 %v494
        %v527 = vunpack.c.l.b16 %v495
        %v528 = vunpack.c.l.b16 %v496
        %v529 = vunpack.c.l.b16 %v497
        %v530 = vunpack.c.l.b16 %v498
        %v531 = vunpack.c.l.b16 %v499
        %v532 = vunpack.c.l.b16 %v500
        %v533 = vpack.c.b16 %v518, %v517
        %v534 = vpack.c.b16 %v520, %v519
        %v535 = vpack.c.b16 %v522, %v521
        %v536 = vpack.c.b16 %v524, %v523
        %v537 = vpack.c.b16 %v526, %v525
        %v538 = vpack.c.b16 %v528, %v527
        %v539 = vpack.c.b16 %v530, %v529
        %v540 = vpack.c.b16 %v532, %v531
        %549 = vmatprep.subr.bf16.mxu0 0
        %550 = vmatpush1.bf16.msra.mxu0 %v533
        %551 = vmatprep.subr.bf16.mxu0 0
        %552 = vmatpush1.bf16.msra.mxu0 %v534
        %553 = vmatprep.subr.bf16.mxu0 0
        %554 = vmatpush1.bf16.msra.mxu0 %v535
        %555 = vmatprep.subr.bf16.mxu0 0
        %556 = vmatpush1.bf16.msra.mxu0 %v536
        %557 = vmatprep.subr.bf16.mxu0 0
        %558 = vmatpush1.bf16.msra.mxu0 %v537
        %559 = vmatprep.subr.bf16.mxu0 0
        %560 = vmatpush1.bf16.msra.mxu0 %v538
        %561 = vmatprep.subr.bf16.mxu0 0
        %562 = vmatpush1.bf16.msra.mxu0 %v539
        %563 = vmatprep.subr.bf16.mxu0 0
        %564 = vmatpush1.bf16.msra.mxu0 %v540
        %565 = vmatprep.subr.bf16.mxu0 0
        %566 = vmatpush1.bf16.msra.mxu0 0
        %567 = vmatprep.subr.bf16.mxu0 0
        %568 = vmatpush1.bf16.msra.mxu0 0
        %569 = vmatprep.subr.bf16.mxu0 0
        %570 = vmatpush1.bf16.msra.mxu0 0
        %571 = vmatprep.subr.bf16.mxu0 0
        %572 = vmatpush1.bf16.msra.mxu0 0
        %573 = vmatprep.subr.bf16.mxu0 0
        %574 = vmatpush1.bf16.msra.mxu0 0
        %575 = vmatprep.subr.bf16.mxu0 0
        %576 = vmatpush1.bf16.msra.mxu0 0
        %577 = vmatprep.subr.bf16.mxu0 0
        %578 = vmatpush1.bf16.msra.mxu0 0
        %579 = vmatprep.subr.bf16.mxu0 0
        %580 = vmatpush1.bf16.msra.mxu0 0
        %581 = vmatprep.mubr.bf16.mxu0 0
        %582 = vmatmul.mubr.bf16.gmra.mrb[0].mxu0 %v477
        %v583 = vpop.f32.mrb[0].mxu0
        %v584 = vadd.f32 0.0, %v583
        %v585 = vpop.f32.mrb[0].mxu0
        %v586 = vpop.f32.mrb[0].mxu0
        %v587 = vadd.f32 0.0, %v586
        %v588 = vpop.f32.mrb[0].mxu0
        %589 = vmatprep.mubr.bf16.mxu0 0
        %590 = vmatmul.mubr.bf16.gmra.mrb[0].mxu0 %v478
        %v591 = vpop.f32.mrb[0].mxu0
        %v592 = vadd.f32 0.0, %v591
        %v593 = vpop.f32.mrb[0].mxu0
        %v594 = vpop.f32.mrb[0].mxu0
        %v595 = vadd.f32 0.0, %v594
        %v596 = vpop.f32.mrb[0].mxu0
        %597 = vmatprep.mubr.bf16.mxu0 0
        %598 = vmatmul.mubr.bf16.gmra.mrb[0].mxu0 %v479
        %v599 = vpop.f32.mrb[0].mxu0
        %v600 = vadd.f32 0.0, %v599
        %v601 = vpop.f32.mrb[0].mxu0
        %v602 = vpop.f32.mrb[0].mxu0
        %v603 = vadd.f32 0.0, %v602
        %v604 = vpop.f32.mrb[0].mxu0
        %605 = vmatprep.mubr.bf16.mxu0 0
        %606 = vmatmul.mubr.bf16.gmra.mrb[0].mxu0 %v480
        %v607 = vpop.f32.mrb[0].mxu0
        %v608 = vadd.f32 0.0, %v607
        %v609 = vpop.f32.mrb[0].mxu0
        %v610 = vpop.f32.mrb[0].mxu0
        %v611 = vadd.f32 0.0, %v610
        %v612 = vpop.f32.mrb[0].mxu0
        %613 = vmatprep.mubr.bf16.mxu0 0
        %614 = vmatmul.mubr.bf16.gmra.mrb[0].mxu0 %v481
        %v615 = vpop.f32.mrb[0].mxu0
        %v616 = vadd.f32 0.0, %v615
        %v617 = vpop.f32.mrb[0].mxu0
        %v618 = vpop.f32.mrb[0].mxu0
        %v619 = vadd.f32 0.0, %v618
        %v620 = vpop.f32.mrb[0].mxu0
        %621 = vmatprep.mubr.bf16.mxu0 0
        %622 = vmatmul.mubr.bf16.gmra.mrb[0].mxu0 %v482
        %v623 = vpop.f32.mrb[0].mxu0
        %v624 = vadd.f32 0.0, %v623
        %v625 = vpop.f32.mrb[0].mxu0
        %v626 = vpop.f32.mrb[0].mxu0
        %v627 = vadd.f32 0.0, %v626
        %v628 = vpop.f32.mrb[0].mxu0
        %629 = vmatprep.mubr.bf16.mxu0 0
        %630 = vmatmul.mubr.bf16.gmra.mrb[0].mxu0 %v483
        %v631 = vpop.f32.mrb[0].mxu0
        %v632 = vadd.f32 0.0, %v631
        %v633 = vpop.f32.mrb[0].mxu0
        %v634 = vpop.f32.mrb[0].mxu0
        %v635 = vadd.f32 0.0, %v634
        %v636 = vpop.f32.mrb[0].mxu0
        %637 = vmatprep.mubr.bf16.mxu0 0
        %638 = vmatmul.mubr.bf16.gmra.mrb[0].mxu0 %v484
        %v639 = vpop.f32.mrb[0].mxu0
        %v640 = vadd.f32 0.0, %v639
        %v641 = vpop.f32.mrb[0].mxu0
        %v642 = vpop.f32.mrb[0].mxu0
        %v643 = vadd.f32 0.0, %v642
        %v644 = vpop.f32.mrb[0].mxu0
        %645 = vdwg.mxu0
        %v646 = vld [vmem:[%s3] sm:$0x1]
        %v648 = vlaneseq
        %v649 = vshrl.u32 %v648, 7
        %v650 = vsub.s32 0, %v649
        %v651 = vrot.slane %v646, %v650
        %v653 = vmul.f32 %v584, %v651
        %v654 = vmul.f32 %v587, %v651
        %v655 = vmul.f32 %v592, %v651
        %v656 = vmul.f32 %v595, %v651
        %v657 = vmul.f32 %v600, %v651
        %v658 = vmul.f32 %v603, %v651
        %v659 = vmul.f32 %v608, %v651
        %v660 = vmul.f32 %v611, %v651
        %v661 = vmul.f32 %v616, %v651
        %v662 = vmul.f32 %v619, %v651
        %v663 = vmul.f32 %v624, %v651
        %v664 = vmul.f32 %v627, %v651
        %v665 = vmul.f32 %v632, %v651
        %v666 = vmul.f32 %v635, %v651
        %v667 = vmul.f32 %v640, %v651
        %v668 = vmul.f32 %v643, %v651
        %v669 = vld [vmem:[%s4] sm:$0x1]
        %v671 = vlaneseq
        %v672 = vshrl.u32 %v671, 7
        %v673 = vsub.s32 0, %v672
        %v674 = vrot.slane %v669, %v673
        %v676 = vadd.f32 %v653, %v674
        %v677 = vadd.f32 %v654, %v674
        %v678 = vadd.f32 %v655, %v674
        %v679 = vadd.f32 %v656, %v674
        %v680 = vadd.f32 %v657, %v674
        %v681 = vadd.f32 %v658, %v674
        %v682 = vadd.f32 %v659, %v674
        %v683 = vadd.f32 %v660, %v674
        %v684 = vadd.f32 %v661, %v674
        %v685 = vadd.f32 %v662, %v674
        %v686 = vadd.f32 %v663, %v674
        %v687 = vadd.f32 %v664, %v674
        %v688 = vadd.f32 %v665, %v674
        %v689 = vadd.f32 %v666, %v674
        %v690 = vadd.f32 %v667, %v674
        %v691 = vadd.f32 %v668, %v674
        %v692 = vmax.f32 %v676, 0.0
        %v693 = vmax.f32 %v677, 0.0
        %v694 = vmax.f32 %v678, 0.0
        %v695 = vmax.f32 %v679, 0.0
        %v696 = vmax.f32 %v680, 0.0
        %v697 = vmax.f32 %v681, 0.0
        %v698 = vmax.f32 %v682, 0.0
        %v699 = vmax.f32 %v683, 0.0
        %v700 = vmax.f32 %v684, 0.0
        %v701 = vmax.f32 %v685, 0.0
        %v702 = vmax.f32 %v686, 0.0
        %v703 = vmax.f32 %v687, 0.0
        %v704 = vmax.f32 %v688, 0.0
        %v705 = vmax.f32 %v689, 0.0
        %v706 = vmax.f32 %v690, 0.0
        %v707 = vmax.f32 %v691, 0.0
        %v708 = vld [vmem:[%s458] sm:$0xff]
        %v709 = vld [vmem:[%s458 + $0x8] sm:$0xff]
        %v710 = vld [vmem:[%s458 + $0x10] sm:$0xff]
        %v711 = vld [vmem:[%s458 + $0x18] sm:$0xff]
        %v712 = vpack.c.bf16 %v709, %v708
        %v713 = vpack.c.bf16 %v711, %v710
        %714 = vmatprep.subr.bf16.mxu0 0
        %715 = vmatpush1.bf16.msra.mxu0 %v533
        %716 = vmatprep.subr.bf16.mxu0 0
        %717 = vmatpush1.bf16.msra.mxu0 %v534
        %718 = vmatprep.subr.bf16.mxu0 0
        %719 = vmatpush1.bf16.msra.mxu0 %v535
        %720 = vmatprep.subr.bf16.mxu0 0
        %721 = vmatpush1.bf16.msra.mxu0 %v536
        %722 = vmatprep.subr.bf16.mxu0 0
        %723 = vmatpush1.bf16.msra.mxu0 %v537
        %724 = vmatprep.subr.bf16.mxu0 0
        %725 = vmatpush1.bf16.msra.mxu0 %v538
        %726 = vmatprep.subr.bf16.mxu0 0
        %727 = vmatpush1.bf16.msra.mxu0 %v539
        %728 = vmatprep.subr.bf16.mxu0 0
        %729 = vmatpush1.bf16.msra.mxu0 %v540
        %730 = vmatprep.subr.bf16.mxu0 0
        %731 = vmatpush1.bf16.msra.mxu0 0
        %732 = vmatprep.subr.bf16.mxu0 0
        %733 = vmatpush1.bf16.msra.mxu0 0
        %734 = vmatprep.subr.bf16.mxu0 0
        %735 = vmatpush1.bf16.msra.mxu0 0
        %736 = vmatprep.subr.bf16.mxu0 0
        %737 = vmatpush1.bf16.msra.mxu0 0
        %738 = vmatprep.subr.bf16.mxu0 0
        %739 = vmatpush1.bf16.msra.mxu0 0
        %740 = vmatprep.subr.bf16.mxu0 0
        %741 = vmatpush1.bf16.msra.mxu0 0
        %742 = vmatprep.subr.bf16.mxu0 0
        %743 = vmatpush1.bf16.msra.mxu0 0
        %744 = vmatprep.subr.bf16.mxu0 0
        %745 = vmatpush1.bf16.msra.mxu0 0
        %746 = vmatprep.mubr.bf16.mxu0 0
        %747 = vmatmul.mubr.bf16.gmra.mrb[0].mxu0 %v712
        %v748 = vpop.f32.mrb[0].mxu0
        %v749 = vadd.f32 0.0, %v748
        %v750 = vpop.f32.mrb[0].mxu0
        %v751 = vpop.f32.mrb[0].mxu0
        %v752 = vadd.f32 0.0, %v751
        %v753 = vpop.f32.mrb[0].mxu0
        %754 = vmatprep.mubr.bf16.mxu0 0
        %755 = vmatmul.mubr.bf16.gmra.mrb[0].mxu0 %v713
        %v756 = vpop.f32.mrb[0].mxu0
        %v757 = vadd.f32 0.0, %v756
        %v758 = vpop.f32.mrb[0].mxu0
        %v759 = vpop.f32.mrb[0].mxu0
        %v760 = vadd.f32 0.0, %v759
        %v761 = vpop.f32.mrb[0].mxu0
        %762 = vdwg.mxu0
        %v763 = vmul.f32 %v749, %v651
        %v764 = vmul.f32 %v752, %v651
        %v765 = vmul.f32 %v757, %v651
        %v766 = vmul.f32 %v760, %v651
        %v767 = vadd.f32 %v763, %v674
        %v768 = vadd.f32 %v764, %v674
        %v769 = vadd.f32 %v765, %v674
        %v770 = vadd.f32 %v766, %v674
        %v771 = vmax.f32 %v767, 0.0
        %v772 = vmax.f32 %v768, 0.0
        %v773 = vmax.f32 %v769, 0.0
        %v774 = vmax.f32 %v770, 0.0
        %p775 = scmp.gt.s32.totalorder %s33, 0
        %s776 = scalar_select %p775, 1, 0
        %s777 = scvt.s32.f32 %s776
        %p778 = scmp.lt.s32.totalorder %s33, 1
        %s779 = scalar_select %p778, 1, 0
        %s780 = scvt.s32.f32 %s779
        %vm781 = vcmask 253952
        %782 = vst.msk [vmem:[#allocation2] sm:$0x1] %vm781, 0.0
        %783 = vst.msk [vmem:[#allocation2 + $0x18] sm:$0x1] %vm781, 0.0
        %784 = vst.msk [vmem:[#allocation2 + $0x30] sm:$0x1] %vm781, 0.0
        %785 = vst.msk [vmem:[#allocation2 + $0x48] sm:$0x1] %vm781, 0.0
        %786 = vst.msk [vmem:[#allocation2 + $0x60] sm:$0x1] %vm781, 0.0
        %787 = vst.msk [vmem:[#allocation2 + $0x78] sm:$0x1] %vm781, 0.0
        %788 = vst.msk [vmem:[#allocation2 + $0x90] sm:$0x1] %vm781, 0.0
        %789 = vst.msk [vmem:[#allocation2 + $0xa8] sm:$0x1] %vm781, 0.0
        %790 = vst.msk [vmem:[#allocation2 + $0xc0] sm:$0x1] %vm781, 0.0
        %791 = vst.msk [vmem:[#allocation2 + $0xd8] sm:$0x1] %vm781, 0.0
        %792 = vst.msk [vmem:[#allocation2 + $0x11] sm:$0x1] %vm781, 0.0
        %793 = vst.msk [vmem:[#allocation2 + $0x29] sm:$0x1] %vm781, 0.0
        %794 = vst.msk [vmem:[#allocation2 + $0x41] sm:$0x1] %vm781, 0.0
        %795 = vst.msk [vmem:[#allocation2 + $0x59] sm:$0x1] %vm781, 0.0
        %796 = vst.msk [vmem:[#allocation2 + $0x71] sm:$0x1] %vm781, 0.0
        %797 = vst.msk [vmem:[#allocation2 + $0x89] sm:$0x1] %vm781, 0.0
        %798 = vst.msk [vmem:[#allocation2 + $0xa1] sm:$0x1] %vm781, 0.0
        %799 = vst.msk [vmem:[#allocation2 + $0xb9] sm:$0x1] %vm781, 0.0
        %800 = vst.msk [vmem:[#allocation2 + $0xd1] sm:$0x1] %vm781, 0.0
        %801 = vst.msk [vmem:[#allocation2 + $0xe9] sm:$0x1] %vm781, 0.0
        %s802 = scalar_lea.vmem [#allocation2], 24
        %vm803 = vcmask 261120
        %804 = vst.msk [vmem:[%s802 + $0x1] sm:$0xff] %vm803, %v692
        %805 = vst.msk [vmem:[%s802 + $0x9] sm:$0xff] %vm803, %v693
        %806 = vst.msk [vmem:[%s802 + $0x19] sm:$0xff] %vm803, %v694
        %807 = vst.msk [vmem:[%s802 + $0x21] sm:$0xff] %vm803, %v695
        %808 = vst.msk [vmem:[%s802 + $0x31] sm:$0xff] %vm803, %v696
        %809 = vst.msk [vmem:[%s802 + $0x39] sm:$0xff] %vm803, %v697
        %810 = vst.msk [vmem:[%s802 + $0x49] sm:$0xff] %vm803, %v698
        %811 = vst.msk [vmem:[%s802 + $0x51] sm:$0xff] %vm803, %v699
        %812 = vst.msk [vmem:[%s802 + $0x61] sm:$0xff] %vm803, %v700
        %813 = vst.msk [vmem:[%s802 + $0x69] sm:$0xff] %vm803, %v701
        %814 = vst.msk [vmem:[%s802 + $0x79] sm:$0xff] %vm803, %v702
        %815 = vst.msk [vmem:[%s802 + $0x81] sm:$0xff] %vm803, %v703
        %816 = vst.msk [vmem:[%s802 + $0x91] sm:$0xff] %vm803, %v704
        %817 = vst.msk [vmem:[%s802 + $0x99] sm:$0xff] %vm803, %v705
        %818 = vst.msk [vmem:[%s802 + $0xa9] sm:$0xff] %vm803, %v706
        %819 = vst.msk [vmem:[%s802 + $0xb1] sm:$0xff] %vm803, %v707
        %v820 = vstv %s777
        %v821 = vmul.f32 %v771, %v820
        %v822 = vmul.f32 %v772, %v820
        %823 = vst.msk [vmem:[#allocation2 + $0x1] sm:$0xff] %vm803, %v821
        %824 = vst.msk [vmem:[#allocation2 + $0x9] sm:$0xff] %vm803, %v822
        %v825 = vstv %s780
        %v826 = vmul.f32 %v773, %v825
        %v827 = vmul.f32 %v774, %v825
        %s828 = scalar_lea.vmem [#allocation2], 216
        %829 = vst.msk [vmem:[%s828 + $0x1] sm:$0xff] %vm803, %v826
        %830 = vst.msk [vmem:[%s828 + $0x9] sm:$0xff] %vm803, %v827
        %v831 = vld [vmem:[#allocation2] sm:$0xff]
        %v832 = vld [vmem:[#allocation2 + $0x8] sm:$0xff]
        %v833 = vld [vmem:[#allocation2 + $0x18] sm:$0xff]
        %v834 = vld [vmem:[#allocation2 + $0x20] sm:$0xff]
        %v835 = vld [vmem:[#allocation2 + $0x30] sm:$0xff]
        %v836 = vld [vmem:[#allocation2 + $0x38] sm:$0xff]
        %v837 = vld [vmem:[#allocation2 + $0x48] sm:$0xff]
        %v838 = vld [vmem:[#allocation2 + $0x50] sm:$0xff]
        %v839 = vld [vmem:[#allocation2 + $0x60] sm:$0xff]
        %v840 = vld [vmem:[#allocation2 + $0x68] sm:$0xff]
        %v841 = vld [vmem:[#allocation2 + $0x78] sm:$0xff]
        %v842 = vld [vmem:[#allocation2 + $0x80] sm:$0xff]
        %v843 = vld [vmem:[#allocation2 + $0x90] sm:$0xff]
        %v844 = vld [vmem:[#allocation2 + $0x98] sm:$0xff]
        %v845 = vld [vmem:[#allocation2 + $0xa8] sm:$0xff]
        %v846 = vld [vmem:[#allocation2 + $0xb0] sm:$0xff]
        %v847 = vpack.c.bf16 %v832, %v831
        %v848 = vpack.c.bf16 %v834, %v833
        %v849 = vpack.c.bf16 %v836, %v835
        %v850 = vpack.c.bf16 %v838, %v837
        %v851 = vpack.c.bf16 %v840, %v839
        %v852 = vpack.c.bf16 %v842, %v841
        %v853 = vpack.c.bf16 %v844, %v843
        %v854 = vpack.c.bf16 %v846, %v845
        %v855 = vld [vmem:[#allocation2 + $0x1] sm:$0xff]
        %v856 = vld [vmem:[#allocation2 + $0x9] sm:$0xff]
        %v857 = vld [vmem:[#allocation2 + $0x19] sm:$0xff]
        %v858 = vld [vmem:[#allocation2 + $0x21] sm:$0xff]
        %v859 = vld [vmem:[#allocation2 + $0x31] sm:$0xff]
        %v860 = vld [vmem:[#allocation2 + $0x39] sm:$0xff]
        %v861 = vld [vmem:[#allocation2 + $0x49] sm:$0xff]
        %v862 = vld [vmem:[#allocation2 + $0x51] sm:$0xff]
        %v863 = vld [vmem:[#allocation2 + $0x61] sm:$0xff]
        %v864 = vld [vmem:[#allocation2 + $0x69] sm:$0xff]
        %v865 = vld [vmem:[#allocation2 + $0x79] sm:$0xff]
        %v866 = vld [vmem:[#allocation2 + $0x81] sm:$0xff]
        %v867 = vld [vmem:[#allocation2 + $0x91] sm:$0xff]
        %v868 = vld [vmem:[#allocation2 + $0x99] sm:$0xff]
        %v869 = vld [vmem:[#allocation2 + $0xa9] sm:$0xff]
        %v870 = vld [vmem:[#allocation2 + $0xb1] sm:$0xff]
        %v871 = vpack.c.bf16 %v856, %v855
        %v872 = vpack.c.bf16 %v858, %v857
        %v873 = vpack.c.bf16 %v860, %v859
        %v874 = vpack.c.bf16 %v862, %v861
        %v875 = vpack.c.bf16 %v864, %v863
        %v876 = vpack.c.bf16 %v866, %v865
        %v877 = vpack.c.bf16 %v868, %v867
        %v878 = vpack.c.bf16 %v870, %v869
        %v879 = vld [vmem:[#allocation2 + $0x2] sm:$0xff]
        %v880 = vld [vmem:[#allocation2 + $0xa] sm:$0xff]
        %v881 = vld [vmem:[#allocation2 + $0x1a] sm:$0xff]
        %v882 = vld [vmem:[#allocation2 + $0x22] sm:$0xff]
        %v883 = vld [vmem:[#allocation2 + $0x32] sm:$0xff]
        %v884 = vld [vmem:[#allocation2 + $0x3a] sm:$0xff]
        %v885 = vld [vmem:[#allocation2 + $0x4a] sm:$0xff]
        %v886 = vld [vmem:[#allocation2 + $0x52] sm:$0xff]
        %v887 = vld [vmem:[#allocation2 + $0x62] sm:$0xff]
        %v888 = vld [vmem:[#allocation2 + $0x6a] sm:$0xff]
        %v889 = vld [vmem:[#allocation2 + $0x7a] sm:$0xff]
        %v890 = vld [vmem:[#allocation2 + $0x82] sm:$0xff]
        %v891 = vld [vmem:[#allocation2 + $0x92] sm:$0xff]
        %v892 = vld [vmem:[#allocation2 + $0x9a] sm:$0xff]
        %v893 = vld [vmem:[#allocation2 + $0xaa] sm:$0xff]
        %v894 = vld [vmem:[#allocation2 + $0xb2] sm:$0xff]
        %v895 = vpack.c.bf16 %v880, %v879
        %v896 = vpack.c.bf16 %v882, %v881
        %v897 = vpack.c.bf16 %v884, %v883
        %v898 = vpack.c.bf16 %v886, %v885
        %v899 = vpack.c.bf16 %v888, %v887
        %v900 = vpack.c.bf16 %v890, %v889
        %v901 = vpack.c.bf16 %v892, %v891
        %v902 = vpack.c.bf16 %v894, %v893
        %911 = vrot.lane.b32.xlu0 %v871, 32
        %v912 = vpop.permute.xlu0 %911
        %913 = vrot.lane.b32.xlu0 %v872, 32
        %v914 = vpop.permute.xlu0 %913
        %915 = vrot.lane.b32.xlu0 %v873, 32
        %v916 = vpop.permute.xlu0 %915
        %917 = vrot.lane.b32.xlu0 %v874, 32
        %v918 = vpop.permute.xlu0 %917
        %919 = vrot.lane.b32.xlu0 %v875, 32
        %v920 = vpop.permute.xlu0 %919
        %921 = vrot.lane.b32.xlu0 %v876, 32
        %v922 = vpop.permute.xlu0 %921
        %923 = vrot.lane.b32.xlu0 %v877, 32
        %v924 = vpop.permute.xlu0 %923
        %925 = vrot.lane.b32.xlu0 %v878, 32
        %v926 = vpop.permute.xlu0 %925
        %935 = vrot.lane.b32.xlu0 %v895, 64
        %v936 = vpop.permute.xlu0 %935
        %937 = vrot.lane.b32.xlu0 %v896, 64
        %v938 = vpop.permute.xlu0 %937
        %939 = vrot.lane.b32.xlu0 %v897, 64
        %v940 = vpop.permute.xlu0 %939
        %941 = vrot.lane.b32.xlu0 %v898, 64
        %v942 = vpop.permute.xlu0 %941
        %943 = vrot.lane.b32.xlu0 %v899, 64
        %v944 = vpop.permute.xlu0 %943
        %945 = vrot.lane.b32.xlu0 %v900, 64
        %v946 = vpop.permute.xlu0 %945
        %947 = vrot.lane.b32.xlu0 %v901, 64
        %v948 = vpop.permute.xlu0 %947
        %949 = vrot.lane.b32.xlu0 %v902, 64
        %v950 = vpop.permute.xlu0 %949
        %v953 = vsel %vm803, %v847, %v912
        %v956 = vsel %vm803, %v848, %v914
        %v959 = vsel %vm803, %v849, %v916
        %v962 = vsel %vm803, %v850, %v918
        %v965 = vsel %vm803, %v851, %v920
        %v968 = vsel %vm803, %v852, %v922
        %v971 = vsel %vm803, %v853, %v924
        %v974 = vsel %vm803, %v854, %v926
        %vm975 = vcmask 523264
        %v977 = vsel %vm975, %v953, %v936
        %v979 = vsel %vm975, %v956, %v938
        %v981 = vsel %vm975, %v959, %v940
        %v983 = vsel %vm975, %v962, %v942
        %v985 = vsel %vm975, %v965, %v944
        %v987 = vsel %vm975, %v968, %v946
        %v989 = vsel %vm975, %v971, %v948
        %v991 = vsel %vm975, %v974, %v950
        %v992 = vld [vmem:[%s5] sm:$0xf]
        %v993 = vld [vmem:[%s5 + $0x4] sm:$0xf]
        %v994 = vld [vmem:[%s5 + $0x8] sm:$0xf]
        %v995 = vld [vmem:[%s5 + $0xc] sm:$0xf]
        %v996 = vld [vmem:[%s5 + $0x10] sm:$0xf]
        %v997 = vld [vmem:[%s5 + $0x14] sm:$0xf]
        %v998 = vld [vmem:[%s5 + $0x18] sm:$0xf]
        %v999 = vld [vmem:[%s5 + $0x1c] sm:$0xf]
        %v1000 = vld [vmem:[%s5 + $0x20] sm:$0xf]
        %v1001 = vld [vmem:[%s5 + $0x24] sm:$0xf]
        %v1002 = vld [vmem:[%s5 + $0x28] sm:$0xf]
        %v1003 = vld [vmem:[%s5 + $0x2c] sm:$0xf]
        %v1004 = vld [vmem:[%s802] sm:$0xff]
        %v1005 = vld [vmem:[%s802 + $0x8] sm:$0xff]
        %v1006 = vld [vmem:[%s802 + $0x18] sm:$0xff]
        %v1007 = vld [vmem:[%s802 + $0x20] sm:$0xff]
        %v1008 = vld [vmem:[%s802 + $0x30] sm:$0xff]
        %v1009 = vld [vmem:[%s802 + $0x38] sm:$0xff]
        %v1010 = vld [vmem:[%s802 + $0x48] sm:$0xff]
        %v1011 = vld [vmem:[%s802 + $0x50] sm:$0xff]
        %v1012 = vld [vmem:[%s802 + $0x60] sm:$0xff]
        %v1013 = vld [vmem:[%s802 + $0x68] sm:$0xff]
        %v1014 = vld [vmem:[%s802 + $0x78] sm:$0xff]
        %v1015 = vld [vmem:[%s802 + $0x80] sm:$0xff]
        %v1016 = vld [vmem:[%s802 + $0x90] sm:$0xff]
        %v1017 = vld [vmem:[%s802 + $0x98] sm:$0xff]
        %v1018 = vld [vmem:[%s802 + $0xa8] sm:$0xff]
        %v1019 = vld [vmem:[%s802 + $0xb0] sm:$0xff]
        %v1020 = vpack.c.bf16 %v1005, %v1004
        %v1021 = vpack.c.bf16 %v1007, %v1006
        %v1022 = vpack.c.bf16 %v1009, %v1008
        %v1023 = vpack.c.bf16 %v1011, %v1010
        %v1024 = vpack.c.bf16 %v1013, %v1012
        %v1025 = vpack.c.bf16 %v1015, %v1014
        %v1026 = vpack.c.bf16 %v1017, %v1016
        %v1027 = vpack.c.bf16 %v1019, %v1018
        %v1028 = vld [vmem:[%s802 + $0x1] sm:$0xff]
        %v1029 = vld [vmem:[%s802 + $0x9] sm:$0xff]
        %v1030 = vld [vmem:[%s802 + $0x19] sm:$0xff]
        %v1031 = vld [vmem:[%s802 + $0x21] sm:$0xff]
        %v1032 = vld [vmem:[%s802 + $0x31] sm:$0xff]
        %v1033 = vld [vmem:[%s802 + $0x39] sm:$0xff]
        %v1034 = vld [vmem:[%s802 + $0x49] sm:$0xff]
        %v1035 = vld [vmem:[%s802 + $0x51] sm:$0xff]
        %v1036 = vld [vmem:[%s802 + $0x61] sm:$0xff]
        %v1037 = vld [vmem:[%s802 + $0x69] sm:$0xff]
        %v1038 = vld [vmem:[%s802 + $0x79] sm:$0xff]
        %v1039 = vld [vmem:[%s802 + $0x81] sm:$0xff]
        %v1040 = vld [vmem:[%s802 + $0x91] sm:$0xff]
        %v1041 = vld [vmem:[%s802 + $0x99] sm:$0xff]
        %v1042 = vld [vmem:[%s802 + $0xa9] sm:$0xff]
        %v1043 = vld [vmem:[%s802 + $0xb1] sm:$0xff]
        %v1044 = vpack.c.bf16 %v1029, %v1028
        %v1045 = vpack.c.bf16 %v1031, %v1030
        %v1046 = vpack.c.bf16 %v1033, %v1032
        %v1047 = vpack.c.bf16 %v1035, %v1034
        %v1048 = vpack.c.bf16 %v1037, %v1036
        %v1049 = vpack.c.bf16 %v1039, %v1038
        %v1050 = vpack.c.bf16 %v1041, %v1040
        %v1051 = vpack.c.bf16 %v1043, %v1042
        %v1052 = vld [vmem:[%s802 + $0x2] sm:$0xff]
        %v1053 = vld [vmem:[%s802 + $0xa] sm:$0xff]
        %v1054 = vld [vmem:[%s802 + $0x1a] sm:$0xff]
        %v1055 = vld [vmem:[%s802 + $0x22] sm:$0xff]
        %v1056 = vld [vmem:[%s802 + $0x32] sm:$0xff]
        %v1057 = vld [vmem:[%s802 + $0x3a] sm:$0xff]
        %v1058 = vld [vmem:[%s802 + $0x4a] sm:$0xff]
        %v1059 = vld [vmem:[%s802 + $0x52] sm:$0xff]
        %v1060 = vld [vmem:[%s802 + $0x62] sm:$0xff]
        %v1061 = vld [vmem:[%s802 + $0x6a] sm:$0xff]
        %v1062 = vld [vmem:[%s802 + $0x7a] sm:$0xff]
        %v1063 = vld [vmem:[%s802 + $0x82] sm:$0xff]
        %v1064 = vld [vmem:[%s802 + $0x92] sm:$0xff]
        %v1065 = vld [vmem:[%s802 + $0x9a] sm:$0xff]
        %v1066 = vld [vmem:[%s802 + $0xaa] sm:$0xff]
        %v1067 = vld [vmem:[%s802 + $0xb2] sm:$0xff]
        %v1068 = vpack.c.bf16 %v1053, %v1052
        %v1069 = vpack.c.bf16 %v1055, %v1054
        %v1070 = vpack.c.bf16 %v1057, %v1056
        %v1071 = vpack.c.bf16 %v1059, %v1058
        %v1072 = vpack.c.bf16 %v1061, %v1060
        %v1073 = vpack.c.bf16 %v1063, %v1062
        %v1074 = vpack.c.bf16 %v1065, %v1064
        %v1075 = vpack.c.bf16 %v1067, %v1066
        %1084 = vrot.lane.b32.xlu0 %v1044, 32
        %v1085 = vpop.permute.xlu0 %1084
        %1086 = vrot.lane.b32.xlu0 %v1045, 32
        %v1087 = vpop.permute.xlu0 %1086
        %1088 = vrot.lane.b32.xlu0 %v1046, 32
        %v1089 = vpop.permute.xlu0 %1088
        %1090 = vrot.lane.b32.xlu0 %v1047, 32
        %v1091 = vpop.permute.xlu0 %1090
        %1092 = vrot.lane.b32.xlu0 %v1048, 32
        %v1093 = vpop.permute.xlu0 %1092
        %1094 = vrot.lane.b32.xlu0 %v1049, 32
        %v1095 = vpop.permute.xlu0 %1094
        %1096 = vrot.lane.b32.xlu0 %v1050, 32
        %v1097 = vpop.permute.xlu0 %1096
        %1098 = vrot.lane.b32.xlu0 %v1051, 32
        %v1099 = vpop.permute.xlu0 %1098
        %1108 = vrot.lane.b32.xlu0 %v1068, 64
        %v1109 = vpop.permute.xlu0 %1108
        %1110 = vrot.lane.b32.xlu0 %v1069, 64
        %v1111 = vpop.permute.xlu0 %1110
        %1112 = vrot.lane.b32.xlu0 %v1070, 64
        %v1113 = vpop.permute.xlu0 %1112
        %1114 = vrot.lane.b32.xlu0 %v1071, 64
        %v1115 = vpop.permute.xlu0 %1114
        %1116 = vrot.lane.b32.xlu0 %v1072, 64
        %v1117 = vpop.permute.xlu0 %1116
        %1118 = vrot.lane.b32.xlu0 %v1073, 64
        %v1119 = vpop.permute.xlu0 %1118
        %1120 = vrot.lane.b32.xlu0 %v1074, 64
        %v1121 = vpop.permute.xlu0 %1120
        %1122 = vrot.lane.b32.xlu0 %v1075, 64
        %v1123 = vpop.permute.xlu0 %1122
        %v1126 = vsel %vm803, %v1020, %v1085
        %v1129 = vsel %vm803, %v1021, %v1087
        %v1132 = vsel %vm803, %v1022, %v1089
        %v1135 = vsel %vm803, %v1023, %v1091
        %v1138 = vsel %vm803, %v1024, %v1093
        %v1141 = vsel %vm803, %v1025, %v1095
        %v1144 = vsel %vm803, %v1026, %v1097
        %v1147 = vsel %vm803, %v1027, %v1099
        %v1149 = vsel %vm975, %v1126, %v1109
        %v1151 = vsel %vm975, %v1129, %v1111
        %v1153 = vsel %vm975, %v1132, %v1113
        %v1155 = vsel %vm975, %v1135, %v1115
        %v1157 = vsel %vm975, %v1138, %v1117
        %v1159 = vsel %vm975, %v1141, %v1119
        %v1161 = vsel %vm975, %v1144, %v1121
        %v1163 = vsel %vm975, %v1147, %v1123
        %s1164 = scalar_lea.vmem %s5, 48
        %v1165 = vld [vmem:[%s1164] sm:$0xf]
        %v1166 = vld [vmem:[%s1164 + $0x4] sm:$0xf]
        %v1167 = vld [vmem:[%s1164 + $0x8] sm:$0xf]
        %v1168 = vld [vmem:[%s1164 + $0xc] sm:$0xf]
        %v1169 = vld [vmem:[%s1164 + $0x10] sm:$0xf]
        %v1170 = vld [vmem:[%s1164 + $0x14] sm:$0xf]
        %v1171 = vld [vmem:[%s1164 + $0x18] sm:$0xf]
        %v1172 = vld [vmem:[%s1164 + $0x1c] sm:$0xf]
        %v1173 = vld [vmem:[%s1164 + $0x20] sm:$0xf]
        %v1174 = vld [vmem:[%s1164 + $0x24] sm:$0xf]
        %v1175 = vld [vmem:[%s1164 + $0x28] sm:$0xf]
        %v1176 = vld [vmem:[%s1164 + $0x2c] sm:$0xf]
        %v1189 = vunpack.c.l.b16 %v1165
        %v1190 = vunpack.c.l.b16 %v1166
        %v1191 = vunpack.c.l.b16 %v1167
        %v1192 = vunpack.c.l.b16 %v1168
        %v1193 = vunpack.c.l.b16 %v1169
        %v1194 = vunpack.c.l.b16 %v1170
        %v1195 = vunpack.c.l.b16 %v1171
        %v1196 = vunpack.c.l.b16 %v1172
        %v1197 = vunpack.c.l.b16 %v1173
        %v1198 = vunpack.c.l.b16 %v1174
        %v1199 = vunpack.c.l.b16 %v1175
        %v1200 = vunpack.c.l.b16 %v1176
        %v1201 = vpack.c.b16 %v1190, %v1189
        %v1202 = vpack.c.b16 %v1192, %v1191
        %v1203 = vpack.c.b16 %v1194, %v1193
        %v1204 = vpack.c.b16 %v1196, %v1195
        %v1205 = vpack.c.b16 %v1198, %v1197
        %v1206 = vpack.c.b16 %v1200, %v1199
        %vm1213 = vcmask 785408
        %v1214 = vsel %vm1213, %v1149, 0
        %v1216 = vsel %vm1213, %v1151, 0
        %v1218 = vsel %vm1213, %v1153, 0
        %v1220 = vsel %vm1213, %v1155, 0
        %v1222 = vsel %vm1213, %v1157, 0
        %v1224 = vsel %vm1213, %v1159, 0
        %v1226 = vsel %vm1213, %v1161, 0
        %v1228 = vsel %vm1213, %v1163, 0
        %1230 = vmatprep.subr.bf16.mxu0 0
        %1231 = vmatpush1.bf16.msra.mxu0 %v1201
        %1232 = vmatprep.subr.bf16.mxu0 0
        %1233 = vmatpush1.bf16.msra.mxu0 %v1202
        %1234 = vmatprep.subr.bf16.mxu0 0
        %1235 = vmatpush1.bf16.msra.mxu0 %v1203
        %1236 = vmatprep.subr.bf16.mxu0 0
        %1237 = vmatpush1.bf16.msra.mxu0 %v1204
        %1238 = vmatprep.subr.bf16.mxu0 0
        %1239 = vmatpush1.bf16.msra.mxu0 %v1205
        %1240 = vmatprep.subr.bf16.mxu0 0
        %1241 = vmatpush1.bf16.msra.mxu0 %v1206
        %1242 = vmatprep.subr.bf16.mxu0 0
        %1243 = vmatpush1.bf16.msra.mxu0 0
        %1244 = vmatprep.subr.bf16.mxu0 0
        %1245 = vmatpush1.bf16.msra.mxu0 0
        %1246 = vmatprep.subr.bf16.mxu0 0
        %1247 = vmatpush1.bf16.msra.mxu0 0
        %1248 = vmatprep.subr.bf16.mxu0 0
        %1249 = vmatpush1.bf16.msra.mxu0 0
        %1250 = vmatprep.subr.bf16.mxu0 0
        %1251 = vmatpush1.bf16.msra.mxu0 0
        %1252 = vmatprep.subr.bf16.mxu0 0
        %1253 = vmatpush1.bf16.msra.mxu0 0
        %1254 = vmatprep.subr.bf16.mxu0 0
        %1255 = vmatpush1.bf16.msra.mxu0 0
        %1256 = vmatprep.subr.bf16.mxu0 0
        %1257 = vmatpush1.bf16.msra.mxu0 0
        %1258 = vmatprep.subr.bf16.mxu0 0
        %1259 = vmatpush1.bf16.msra.mxu0 0
        %1260 = vmatprep.subr.bf16.mxu0 0
        %1261 = vmatpush1.bf16.msra.mxu0 0
        %1262 = vmatprep.mubr.bf16.mxu0 0
        %1263 = vmatmul.mubr.bf16.gmra.mrb[0].mxu0 %v1214
        %v1264 = vpop.f32.mrb[0].mxu0
        %v1265 = vadd.f32 0.0, %v1264
        %v1266 = vpop.f32.mrb[0].mxu0
        %v1267 = vpop.f32.mrb[0].mxu0
        %v1268 = vadd.f32 0.0, %v1267
        %v1269 = vpop.f32.mrb[0].mxu0
        %1270 = vmatprep.mubr.bf16.mxu0 0
        %1271 = vmatmul.mubr.bf16.gmra.mrb[0].mxu0 %v1216
        %v1272 = vpop.f32.mrb[0].mxu0
        %v1273 = vadd.f32 0.0, %v1272
        %v1274 = vpop.f32.mrb[0].mxu0
        %v1275 = vpop.f32.mrb[0].mxu0
        %v1276 = vadd.f32 0.0, %v1275
        %v1277 = vpop.f32.mrb[0].mxu0
        %1278 = vmatprep.mubr.bf16.mxu0 0
        %1279 = vmatmul.mubr.bf16.gmra.mrb[0].mxu0 %v1218
        %v1280 = vpop.f32.mrb[0].mxu0
        %v1281 = vadd.f32 0.0, %v1280
        %v1282 = vpop.f32.mrb[0].mxu0
        %v1283 = vpop.f32.mrb[0].mxu0
        %v1284 = vadd.f32 0.0, %v1283
        %v1285 = vpop.f32.mrb[0].mxu0
        %1286 = vmatprep.mubr.bf16.mxu0 0
        %1287 = vmatmul.mubr.bf16.gmra.mrb[0].mxu0 %v1220
        %v1288 = vpop.f32.mrb[0].mxu0
        %v1289 = vadd.f32 0.0, %v1288
        %v1290 = vpop.f32.mrb[0].mxu0
        %v1291 = vpop.f32.mrb[0].mxu0
        %v1292 = vadd.f32 0.0, %v1291
        %v1293 = vpop.f32.mrb[0].mxu0
        %1294 = vmatprep.mubr.bf16.mxu0 0
        %1295 = vmatmul.mubr.bf16.gmra.mrb[0].mxu0 %v1222
        %v1296 = vpop.f32.mrb[0].mxu0
        %v1297 = vadd.f32 0.0, %v1296
        %v1298 = vpop.f32.mrb[0].mxu0
        %v1299 = vpop.f32.mrb[0].mxu0
        %v1300 = vadd.f32 0.0, %v1299
        %v1301 = vpop.f32.mrb[0].mxu0
        %1302 = vmatprep.mubr.bf16.mxu0 0
        %1303 = vmatmul.mubr.bf16.gmra.mrb[0].mxu0 %v1224
        %v1304 = vpop.f32.mrb[0].mxu0
        %v1305 = vadd.f32 0.0, %v1304
        %v1306 = vpop.f32.mrb[0].mxu0
        %v1307 = vpop.f32.mrb[0].mxu0
        %v1308 = vadd.f32 0.0, %v1307
        %v1309 = vpop.f32.mrb[0].mxu0
        %1310 = vmatprep.mubr.bf16.mxu0 0
        %1311 = vmatmul.mubr.bf16.gmra.mrb[0].mxu0 %v1226
        %v1312 = vpop.f32.mrb[0].mxu0
        %v1313 = vadd.f32 0.0, %v1312
        %v1314 = vpop.f32.mrb[0].mxu0
        %v1315 = vpop.f32.mrb[0].mxu0
        %v1316 = vadd.f32 0.0, %v1315
        %v1317 = vpop.f32.mrb[0].mxu0
        %1318 = vmatprep.mubr.bf16.mxu0 0
        %1319 = vmatmul.mubr.bf16.gmra.mrb[0].mxu0 %v1228
        %v1320 = vpop.f32.mrb[0].mxu0
        %v1321 = vadd.f32 0.0, %v1320
        %v1322 = vpop.f32.mrb[0].mxu0
        %v1323 = vpop.f32.mrb[0].mxu0
        %v1324 = vadd.f32 0.0, %v1323
        %v1325 = vpop.f32.mrb[0].mxu0
        %1326 = vdwg.mxu0
        %v1339 = vunpack.c.l.b16 %v992
        %v1340 = vunpack.c.l.b16 %v993
        %v1341 = vunpack.c.l.b16 %v994
        %v1342 = vunpack.c.l.b16 %v995
        %v1343 = vunpack.c.l.b16 %v996
        %v1344 = vunpack.c.l.b16 %v997
        %v1345 = vunpack.c.l.b16 %v998
        %v1346 = vunpack.c.l.b16 %v999
        %v1347 = vunpack.c.l.b16 %v1000
        %v1348 = vunpack.c.l.b16 %v1001
        %v1349 = vunpack.c.l.b16 %v1002
        %v1350 = vunpack.c.l.b16 %v1003
        %v1351 = vpack.c.b16 %v1340, %v1339
        %v1352 = vpack.c.b16 %v1342, %v1341
        %v1353 = vpack.c.b16 %v1344, %v1343
        %v1354 = vpack.c.b16 %v1346, %v1345
        %v1355 = vpack.c.b16 %v1348, %v1347
        %v1356 = vpack.c.b16 %v1350, %v1349
        %v1363 = vsel %vm1213, %v977, 0
        %v1365 = vsel %vm1213, %v979, 0
        %v1367 = vsel %vm1213, %v981, 0
        %v1369 = vsel %vm1213, %v983, 0
        %v1371 = vsel %vm1213, %v985, 0
        %v1373 = vsel %vm1213, %v987, 0
        %v1375 = vsel %vm1213, %v989, 0
        %v1377 = vsel %vm1213, %v991, 0
        %1379 = vmatprep.subr.bf16.mxu0 0
        %1380 = vmatpush1.bf16.msra.mxu0 %v1351
        %1381 = vmatprep.subr.bf16.mxu0 0
        %1382 = vmatpush1.bf16.msra.mxu0 %v1352
        %1383 = vmatprep.subr.bf16.mxu0 0
        %1384 = vmatpush1.bf16.msra.mxu0 %v1353
        %1385 = vmatprep.subr.bf16.mxu0 0
        %1386 = vmatpush1.bf16.msra.mxu0 %v1354
        %1387 = vmatprep.subr.bf16.mxu0 0
        %1388 = vmatpush1.bf16.msra.mxu0 %v1355
        %1389 = vmatprep.subr.bf16.mxu0 0
        %1390 = vmatpush1.bf16.msra.mxu0 %v1356
        %1391 = vmatprep.subr.bf16.mxu0 0
        %1392 = vmatpush1.bf16.msra.mxu0 0
        %1393 = vmatprep.subr.bf16.mxu0 0
        %1394 = vmatpush1.bf16.msra.mxu0 0
        %1395 = vmatprep.subr.bf16.mxu0 0
        %1396 = vmatpush1.bf16.msra.mxu0 0
        %1397 = vmatprep.subr.bf16.mxu0 0
        %1398 = vmatpush1.bf16.msra.mxu0 0
        %1399 = vmatprep.subr.bf16.mxu0 0
        %1400 = vmatpush1.bf16.msra.mxu0 0
        %1401 = vmatprep.subr.bf16.mxu0 0
        %1402 = vmatpush1.bf16.msra.mxu0 0
        %1403 = vmatprep.subr.bf16.mxu0 0
        %1404 = vmatpush1.bf16.msra.mxu0 0
        %1405 = vmatprep.subr.bf16.mxu0 0
        %1406 = vmatpush1.bf16.msra.mxu0 0
        %1407 = vmatprep.subr.bf16.mxu0 0
        %1408 = vmatpush1.bf16.msra.mxu0 0
        %1409 = vmatprep.subr.bf16.mxu0 0
        %1410 = vmatpush1.bf16.msra.mxu0 0
        %1411 = vmatprep.mubr.bf16.mxu0 0
        %1412 = vmatmul.mubr.bf16.gmra.mrb[0].mxu0 %v1363
        %v1413 = vpop.f32.mrb[0].mxu0
        %v1414 = vadd.f32 %v1265, %v1413
        %v1415 = vpop.f32.mrb[0].mxu0
        %v1416 = vpop.f32.mrb[0].mxu0
        %v1417 = vadd.f32 %v1268, %v1416
        %v1418 = vpop.f32.mrb[0].mxu0
        %1419 = vmatprep.mubr.bf16.mxu0 0
        %1420 = vmatmul.mubr.bf16.gmra.mrb[0].mxu0 %v1365
        %v1421 = vpop.f32.mrb[0].mxu0
        %v1422 = vadd.f32 %v1273, %v1421
        %v1423 = vpop.f32.mrb[0].mxu0
        %v1424 = vpop.f32.mrb[0].mxu0
        %v1425 = vadd.f32 %v1276, %v1424
        %v1426 = vpop.f32.mrb[0].mxu0
        %1427 = vmatprep.mubr.bf16.mxu0 0
        %1428 = vmatmul.mubr.bf16.gmra.mrb[0].mxu0 %v1367
        %v1429 = vpop.f32.mrb[0].mxu0
        %v1430 = vadd.f32 %v1281, %v1429
        %v1431 = vpop.f32.mrb[0].mxu0
        %v1432 = vpop.f32.mrb[0].mxu0
        %v1433 = vadd.f32 %v1284, %v1432
        %v1434 = vpop.f32.mrb[0].mxu0
        %1435 = vmatprep.mubr.bf16.mxu0 0
        %1436 = vmatmul.mubr.bf16.gmra.mrb[0].mxu0 %v1369
        %v1437 = vpop.f32.mrb[0].mxu0
        %v1438 = vadd.f32 %v1289, %v1437
        %v1439 = vpop.f32.mrb[0].mxu0
        %v1440 = vpop.f32.mrb[0].mxu0
        %v1441 = vadd.f32 %v1292, %v1440
        %v1442 = vpop.f32.mrb[0].mxu0
        %1443 = vmatprep.mubr.bf16.mxu0 0
        %1444 = vmatmul.mubr.bf16.gmra.mrb[0].mxu0 %v1371
        %v1445 = vpop.f32.mrb[0].mxu0
        %v1446 = vadd.f32 %v1297, %v1445
        %v1447 = vpop.f32.mrb[0].mxu0
        %v1448 = vpop.f32.mrb[0].mxu0
        %v1449 = vadd.f32 %v1300, %v1448
        %v1450 = vpop.f32.mrb[0].mxu0
        %1451 = vmatprep.mubr.bf16.mxu0 0
        %1452 = vmatmul.mubr.bf16.gmra.mrb[0].mxu0 %v1373
        %v1453 = vpop.f32.mrb[0].mxu0
        %v1454 = vadd.f32 %v1305, %v1453
        %v1455 = vpop.f32.mrb[0].mxu0
        %v1456 = vpop.f32.mrb[0].mxu0
        %v1457 = vadd.f32 %v1308, %v1456
        %v1458 = vpop.f32.mrb[0].mxu0
        %1459 = vmatprep.mubr.bf16.mxu0 0
        %1460 = vmatmul.mubr.bf16.gmra.mrb[0].mxu0 %v1375
        %v1461 = vpop.f32.mrb[0].mxu0
        %v1462 = vadd.f32 %v1313, %v1461
        %v1463 = vpop.f32.mrb[0].mxu0
        %v1464 = vpop.f32.mrb[0].mxu0
        %v1465 = vadd.f32 %v1316, %v1464
        %v1466 = vpop.f32.mrb[0].mxu0
        %1467 = vmatprep.mubr.bf16.mxu0 0
        %1468 = vmatmul.mubr.bf16.gmra.mrb[0].mxu0 %v1377
        %v1469 = vpop.f32.mrb[0].mxu0
        %v1470 = vadd.f32 %v1321, %v1469
        %v1471 = vpop.f32.mrb[0].mxu0
        %v1472 = vpop.f32.mrb[0].mxu0
        %v1473 = vadd.f32 %v1324, %v1472
        %v1474 = vpop.f32.mrb[0].mxu0
        %1475 = vdwg.mxu0
        %s1476 = scalar_lea.vmem [#allocation2], 48
        %v1477 = vld [vmem:[%s1476] sm:$0xff]
        %v1478 = vld [vmem:[%s1476 + $0x8] sm:$0xff]
        %v1479 = vld [vmem:[%s1476 + $0x18] sm:$0xff]
        %v1480 = vld [vmem:[%s1476 + $0x20] sm:$0xff]
        %v1481 = vld [vmem:[%s1476 + $0x30] sm:$0xff]
        %v1482 = vld [vmem:[%s1476 + $0x38] sm:$0xff]
        %v1483 = vld [vmem:[%s1476 + $0x48] sm:$0xff]
        %v1484 = vld [vmem:[%s1476 + $0x50] sm:$0xff]
        %v1485 = vld [vmem:[%s1476 + $0x60] sm:$0xff]
        %v1486 = vld [vmem:[%s1476 + $0x68] sm:$0xff]
        %v1487 = vld [vmem:[%s1476 + $0x78] sm:$0xff]
        %v1488 = vld [vmem:[%s1476 + $0x80] sm:$0xff]
        %v1489 = vld [vmem:[%s1476 + $0x90] sm:$0xff]
        %v1490 = vld [vmem:[%s1476 + $0x98] sm:$0xff]
        %v1491 = vld [vmem:[%s1476 + $0xa8] sm:$0xff]
        %v1492 = vld [vmem:[%s1476 + $0xb0] sm:$0xff]
        %v1493 = vpack.c.bf16 %v1478, %v1477
        %v1494 = vpack.c.bf16 %v1480, %v1479
        %v1495 = vpack.c.bf16 %v1482, %v1481
        %v1496 = vpack.c.bf16 %v1484, %v1483
        %v1497 = vpack.c.bf16 %v1486, %v1485
        %v1498 = vpack.c.bf16 %v1488, %v1487
        %v1499 = vpack.c.bf16 %v1490, %v1489
        %v1500 = vpack.c.bf16 %v1492, %v1491
        %v1501 = vld [vmem:[%s1476 + $0x1] sm:$0xff]
        %v1502 = vld [vmem:[%s1476 + $0x9] sm:$0xff]
        %v1503 = vld [vmem:[%s1476 + $0x19] sm:$0xff]
        %v1504 = vld [vmem:[%s1476 + $0x21] sm:$0xff]
        %v1505 = vld [vmem:[%s1476 + $0x31] sm:$0xff]
        %v1506 = vld [vmem:[%s1476 + $0x39] sm:$0xff]
        %v1507 = vld [vmem:[%s1476 + $0x49] sm:$0xff]
        %v1508 = vld [vmem:[%s1476 + $0x51] sm:$0xff]
        %v1509 = vld [vmem:[%s1476 + $0x61] sm:$0xff]
        %v1510 = vld [vmem:[%s1476 + $0x69] sm:$0xff]
        %v1511 = vld [vmem:[%s1476 + $0x79] sm:$0xff]
        %v1512 = vld [vmem:[%s1476 + $0x81] sm:$0xff]
        %v1513 = vld [vmem:[%s1476 + $0x91] sm:$0xff]
        %v1514 = vld [vmem:[%s1476 + $0x99] sm:$0xff]
        %v1515 = vld [vmem:[%s1476 + $0xa9] sm:$0xff]
        %v1516 = vld [vmem:[%s1476 + $0xb1] sm:$0xff]
        %v1517 = vpack.c.bf16 %v1502, %v1501
        %v1518 = vpack.c.bf16 %v1504, %v1503
        %v1519 = vpack.c.bf16 %v1506, %v1505
        %v1520 = vpack.c.bf16 %v1508, %v1507
        %v1521 = vpack.c.bf16 %v1510, %v1509
        %v1522 = vpack.c.bf16 %v1512, %v1511
        %v1523 = vpack.c.bf16 %v1514, %v1513
        %v1524 = vpack.c.bf16 %v1516, %v1515
        %v1525 = vld [vmem:[%s1476 + $0x2] sm:$0xff]
        %v1526 = vld [vmem:[%s1476 + $0xa] sm:$0xff]
        %v1527 = vld [vmem:[%s1476 + $0x1a] sm:$0xff]
        %v1528 = vld [vmem:[%s1476 + $0x22] sm:$0xff]
        %v1529 = vld [vmem:[%s1476 + $0x32] sm:$0xff]
        %v1530 = vld [vmem:[%s1476 + $0x3a] sm:$0xff]
        %v1531 = vld [vmem:[%s1476 + $0x4a] sm:$0xff]
        %v1532 = vld [vmem:[%s1476 + $0x52] sm:$0xff]
        %v1533 = vld [vmem:[%s1476 + $0x62] sm:$0xff]
        %v1534 = vld [vmem:[%s1476 + $0x6a] sm:$0xff]
        %v1535 = vld [vmem:[%s1476 + $0x7a] sm:$0xff]
        %v1536 = vld [vmem:[%s1476 + $0x82] sm:$0xff]
        %v1537 = vld [vmem:[%s1476 + $0x92] sm:$0xff]
        %v1538 = vld [vmem:[%s1476 + $0x9a] sm:$0xff]
        %v1539 = vld [vmem:[%s1476 + $0xaa] sm:$0xff]
        %v1540 = vld [vmem:[%s1476 + $0xb2] sm:$0xff]
        %v1541 = vpack.c.bf16 %v1526, %v1525
        %v1542 = vpack.c.bf16 %v1528, %v1527
        %v1543 = vpack.c.bf16 %v1530, %v1529
        %v1544 = vpack.c.bf16 %v1532, %v1531
        %v1545 = vpack.c.bf16 %v1534, %v1533
        %v1546 = vpack.c.bf16 %v1536, %v1535
        %v1547 = vpack.c.bf16 %v1538, %v1537
        %v1548 = vpack.c.bf16 %v1540, %v1539
        %1557 = vrot.lane.b32.xlu0 %v1517, 32
        %v1558 = vpop.permute.xlu0 %1557
        %1559 = vrot.lane.b32.xlu0 %v1518, 32
        %v1560 = vpop.permute.xlu0 %1559
        %1561 = vrot.lane.b32.xlu0 %v1519, 32
        %v1562 = vpop.permute.xlu0 %1561
        %1563 = vrot.lane.b32.xlu0 %v1520, 32
        %v1564 = vpop.permute.xlu0 %1563
        %1565 = vrot.lane.b32.xlu0 %v1521, 32
        %v1566 = vpop.permute.xlu0 %1565
        %1567 = vrot.lane.b32.xlu0 %v1522, 32
        %v1568 = vpop.permute.xlu0 %1567
        %1569 = vrot.lane.b32.xlu0 %v1523, 32
        %v1570 = vpop.permute.xlu0 %1569
        %1571 = vrot.lane.b32.xlu0 %v1524, 32
        %v1572 = vpop.permute.xlu0 %1571
        %1581 = vrot.lane.b32.xlu0 %v1541, 64
        %v1582 = vpop.permute.xlu0 %1581
        %1583 = vrot.lane.b32.xlu0 %v1542, 64
        %v1584 = vpop.permute.xlu0 %1583
        %1585 = vrot.lane.b32.xlu0 %v1543, 64
        %v1586 = vpop.permute.xlu0 %1585
        %1587 = vrot.lane.b32.xlu0 %v1544, 64
        %v1588 = vpop.permute.xlu0 %1587
        %1589 = vrot.lane.b32.xlu0 %v1545, 64
        %v1590 = vpop.permute.xlu0 %1589
        %1591 = vrot.lane.b32.xlu0 %v1546, 64
        %v1592 = vpop.permute.xlu0 %1591
        %1593 = vrot.lane.b32.xlu0 %v1547, 64
        %v1594 = vpop.permute.xlu0 %1593
        %1595 = vrot.lane.b32.xlu0 %v1548, 64
        %v1596 = vpop.permute.xlu0 %1595
        %v1599 = vsel %vm803, %v1493, %v1558
        %v1602 = vsel %vm803, %v1494, %v1560
        %v1605 = vsel %vm803, %v1495, %v1562
        %v1608 = vsel %vm803, %v1496, %v1564
        %v1611 = vsel %vm803, %v1497, %v1566
        %v1614 = vsel %vm803, %v1498, %v1568
        %v1617 = vsel %vm803, %v1499, %v1570
        %v1620 = vsel %vm803, %v1500, %v1572
        %v1622 = vsel %vm975, %v1599, %v1582
        %v1624 = vsel %vm975, %v1602, %v1584
        %v1626 = vsel %vm975, %v1605, %v1586
        %v1628 = vsel %vm975, %v1608, %v1588
        %v1630 = vsel %vm975, %v1611, %v1590
        %v1632 = vsel %vm975, %v1614, %v1592
        %v1634 = vsel %vm975, %v1617, %v1594
        %v1636 = vsel %vm975, %v1620, %v1596
        %s1637 = scalar_lea.vmem %s5, 96
        %v1638 = vld [vmem:[%s1637] sm:$0xf]
        %v1639 = vld [vmem:[%s1637 + $0x4] sm:$0xf]
        %v1640 = vld [vmem:[%s1637 + $0x8] sm:$0xf]
        %v1641 = vld [vmem:[%s1637 + $0xc] sm:$0xf]
        %v1642 = vld [vmem:[%s1637 + $0x10] sm:$0xf]
        %v1643 = vld [vmem:[%s1637 + $0x14] sm:$0xf]
        %v1644 = vld [vmem:[%s1637 + $0x18] sm:$0xf]
        %v1645 = vld [vmem:[%s1637 + $0x1c] sm:$0xf]
        %v1646 = vld [vmem:[%s1637 + $0x20] sm:$0xf]
        %v1647 = vld [vmem:[%s1637 + $0x24] sm:$0xf]
        %v1648 = vld [vmem:[%s1637 + $0x28] sm:$0xf]
        %v1649 = vld [vmem:[%s1637 + $0x2c] sm:$0xf]
        %v1662 = vunpack.c.l.b16 %v1638
        %v1663 = vunpack.c.l.b16 %v1639
        %v1664 = vunpack.c.l.b16 %v1640
        %v1665 = vunpack.c.l.b16 %v1641
        %v1666 = vunpack.c.l.b16 %v1642
        %v1667 = vunpack.c.l.b16 %v1643
        %v1668 = vunpack.c.l.b16 %v1644
        %v1669 = vunpack.c.l.b16 %v1645
        %v1670 = vunpack.c.l.b16 %v1646
        %v1671 = vunpack.c.l.b16 %v1647
        %v1672 = vunpack.c.l.b16 %v1648
        %v1673 = vunpack.c.l.b16 %v1649
        %v1674 = vpack.c.b16 %v1663, %v1662
        %v1675 = vpack.c.b16 %v1665, %v1664
        %v1676 = vpack.c.b16 %v1667, %v1666
        %v1677 = vpack.c.b16 %v1669, %v1668
        %v1678 = vpack.c.b16 %v1671, %v1670
        %v1679 = vpack.c.b16 %v1673, %v1672
        %v1686 = vsel %vm1213, %v1622, 0
        %v1688 = vsel %vm1213, %v1624, 0
        %v1690 = vsel %vm1213, %v1626, 0
        %v1692 = vsel %vm1213, %v1628, 0
        %v1694 = vsel %vm1213, %v1630, 0
        %v1696 = vsel %vm1213, %v1632, 0
        %v1698 = vsel %vm1213, %v1634, 0
        %v1700 = vsel %vm1213, %v1636, 0
        %1702 = vmatprep.subr.bf16.mxu0 0
        %1703 = vmatpush1.bf16.msra.mxu0 %v1674
        %1704 = vmatprep.subr.bf16.mxu0 0
        %1705 = vmatpush1.bf16.msra.mxu0 %v1675
        %1706 = vmatprep.subr.bf16.mxu0 0
        %1707 = vmatpush1.bf16.msra.mxu0 %v1676
        %1708 = vmatprep.subr.bf16.mxu0 0
        %1709 = vmatpush1.bf16.msra.mxu0 %v1677
        %1710 = vmatprep.subr.bf16.mxu0 0
        %1711 = vmatpush1.bf16.msra.mxu0 %v1678
        %1712 = vmatprep.subr.bf16.mxu0 0
        %1713 = vmatpush1.bf16.msra.mxu0 %v1679
        %1714 = vmatprep.subr.bf16.mxu0 0
        %1715 = vmatpush1.bf16.msra.mxu0 0
        %1716 = vmatprep.subr.bf16.mxu0 0
        %1717 = vmatpush1.bf16.msra.mxu0 0
        %1718 = vmatprep.subr.bf16.mxu0 0
        %1719 = vmatpush1.bf16.msra.mxu0 0
        %1720 = vmatprep.subr.bf16.mxu0 0
        %1721 = vmatpush1.bf16.msra.mxu0 0
        %1722 = vmatprep.subr.bf16.mxu0 0
        %1723 = vmatpush1.bf16.msra.mxu0 0
        %1724 = vmatprep.subr.bf16.mxu0 0
        %1725 = vmatpush1.bf16.msra.mxu0 0
        %1726 = vmatprep.subr.bf16.mxu0 0
        %1727 = vmatpush1.bf16.msra.mxu0 0
        %1728 = vmatprep.subr.bf16.mxu0 0
        %1729 = vmatpush1.bf16.msra.mxu0 0
        %1730 = vmatprep.subr.bf16.mxu0 0
        %1731 = vmatpush1.bf16.msra.mxu0 0
        %1732 = vmatprep.subr.bf16.mxu0 0
        %1733 = vmatpush1.bf16.msra.mxu0 0
        %1734 = vmatprep.mubr.bf16.mxu0 0
        %1735 = vmatmul.mubr.bf16.gmra.mrb[0].mxu0 %v1686
        %v1736 = vpop.f32.mrb[0].mxu0
        %v1737 = vadd.f32 0.0, %v1736
        %v1738 = vpop.f32.mrb[0].mxu0
        %v1739 = vpop.f32.mrb[0].mxu0
        %v1740 = vadd.f32 0.0, %v1739
        %v1741 = vpop.f32.mrb[0].mxu0
        %1742 = vmatprep.mubr.bf16.mxu0 0
        %1743 = vmatmul.mubr.bf16.gmra.mrb[0].mxu0 %v1688
        %v1744 = vpop.f32.mrb[0].mxu0
        %v1745 = vadd.f32 0.0, %v1744
        %v1746 = vpop.f32.mrb[0].mxu0
        %v1747 = vpop.f32.mrb[0].mxu0
        %v1748 = vadd.f32 0.0, %v1747
        %v1749 = vpop.f32.mrb[0].mxu0
        %1750 = vmatprep.mubr.bf16.mxu0 0
        %1751 = vmatmul.mubr.bf16.gmra.mrb[0].mxu0 %v1690
        %v1752 = vpop.f32.mrb[0].mxu0
        %v1753 = vadd.f32 0.0, %v1752
        %v1754 = vpop.f32.mrb[0].mxu0
        %v1755 = vpop.f32.mrb[0].mxu0
        %v1756 = vadd.f32 0.0, %v1755
        %v1757 = vpop.f32.mrb[0].mxu0
        %1758 = vmatprep.mubr.bf16.mxu0 0
        %1759 = vmatmul.mubr.bf16.gmra.mrb[0].mxu0 %v1692
        %v1760 = vpop.f32.mrb[0].mxu0
        %v1761 = vadd.f32 0.0, %v1760
        %v1762 = vpop.f32.mrb[0].mxu0
        %v1763 = vpop.f32.mrb[0].mxu0
        %v1764 = vadd.f32 0.0, %v1763
        %v1765 = vpop.f32.mrb[0].mxu0
        %1766 = vmatprep.mubr.bf16.mxu0 0
        %1767 = vmatmul.mubr.bf16.gmra.mrb[0].mxu0 %v1694
        %v1768 = vpop.f32.mrb[0].mxu0
        %v1769 = vadd.f32 0.0, %v1768
        %v1770 = vpop.f32.mrb[0].mxu0
        %v1771 = vpop.f32.mrb[0].mxu0
        %v1772 = vadd.f32 0.0, %v1771
        %v1773 = vpop.f32.mrb[0].mxu0
        %1774 = vmatprep.mubr.bf16.mxu0 0
        %1775 = vmatmul.mubr.bf16.gmra.mrb[0].mxu0 %v1696
        %v1776 = vpop.f32.mrb[0].mxu0
        %v1777 = vadd.f32 0.0, %v1776
        %v1778 = vpop.f32.mrb[0].mxu0
        %v1779 = vpop.f32.mrb[0].mxu0
        %v1780 = vadd.f32 0.0, %v1779
        %v1781 = vpop.f32.mrb[0].mxu0
        %1782 = vmatprep.mubr.bf16.mxu0 0
        %1783 = vmatmul.mubr.bf16.gmra.mrb[0].mxu0 %v1698
        %v1784 = vpop.f32.mrb[0].mxu0
        %v1785 = vadd.f32 0.0, %v1784
        %v1786 = vpop.f32.mrb[0].mxu0
        %v1787 = vpop.f32.mrb[0].mxu0
        %v1788 = vadd.f32 0.0, %v1787
        %v1789 = vpop.f32.mrb[0].mxu0
        %1790 = vmatprep.mubr.bf16.mxu0 0
        %1791 = vmatmul.mubr.bf16.gmra.mrb[0].mxu0 %v1700
        %v1792 = vpop.f32.mrb[0].mxu0
        %v1793 = vadd.f32 0.0, %v1792
        %v1794 = vpop.f32.mrb[0].mxu0
        %v1795 = vpop.f32.mrb[0].mxu0
        %v1796 = vadd.f32 0.0, %v1795
        %v1797 = vpop.f32.mrb[0].mxu0
        %1798 = vdwg.mxu0
        %v1799 = vadd.f32 %v1414, %v1737
        %v1800 = vadd.f32 %v1417, %v1740
        %v1801 = vadd.f32 %v1422, %v1745
        %v1802 = vadd.f32 %v1425, %v1748
        %v1803 = vadd.f32 %v1430, %v1753
        %v1804 = vadd.f32 %v1433, %v1756
        %v1805 = vadd.f32 %v1438, %v1761
        %v1806 = vadd.f32 %v1441, %v1764
        %v1807 = vadd.f32 %v1446, %v1769
        %v1808 = vadd.f32 %v1449, %v1772
        %v1809 = vadd.f32 %v1454, %v1777
        %v1810 = vadd.f32 %v1457, %v1780
        %v1811 = vadd.f32 %v1462, %v1785
        %v1812 = vadd.f32 %v1465, %v1788
        %v1813 = vadd.f32 %v1470, %v1793
        %v1814 = vadd.f32 %v1473, %v1796
        %v1815 = vld [vmem:[%s6] sm:$0x1]
        %v1817 = vlaneseq
        %v1818 = vshrl.u32 %v1817, 7
        %v1819 = vsub.s32 0, %v1818
        %v1820 = vrot.slane %v1815, %v1819
        %v1822 = vmul.f32 %v1799, %v1820
        %v1823 = vmul.f32 %v1800, %v1820
        %v1824 = vmul.f32 %v1801, %v1820
        %v1825 = vmul.f32 %v1802, %v1820
        %v1826 = vmul.f32 %v1803, %v1820
        %v1827 = vmul.f32 %v1804, %v1820
        %v1828 = vmul.f32 %v1805, %v1820
        %v1829 = vmul.f32 %v1806, %v1820
        %v1830 = vmul.f32 %v1807, %v1820
        %v1831 = vmul.f32 %v1808, %v1820
        %v1832 = vmul.f32 %v1809, %v1820
        %v1833 = vmul.f32 %v1810, %v1820
        %v1834 = vmul.f32 %v1811, %v1820
        %v1835 = vmul.f32 %v1812, %v1820
        %v1836 = vmul.f32 %v1813, %v1820
        %v1837 = vmul.f32 %v1814, %v1820
        %v1838 = vld [vmem:[%s7] sm:$0x1]
        %v1840 = vlaneseq
        %v1841 = vshrl.u32 %v1840, 7
        %v1842 = vsub.s32 0, %v1841
        %v1843 = vrot.slane %v1838, %v1842
        %v1845 = vadd.f32 %v1822, %v1843
        %v1846 = vadd.f32 %v1823, %v1843
        %v1847 = vadd.f32 %v1824, %v1843
        %v1848 = vadd.f32 %v1825, %v1843
        %v1849 = vadd.f32 %v1826, %v1843
        %v1850 = vadd.f32 %v1827, %v1843
        %v1851 = vadd.f32 %v1828, %v1843
        %v1852 = vadd.f32 %v1829, %v1843
        %v1853 = vadd.f32 %v1830, %v1843
        %v1854 = vadd.f32 %v1831, %v1843
        %v1855 = vadd.f32 %v1832, %v1843
        %v1856 = vadd.f32 %v1833, %v1843
        %v1857 = vadd.f32 %v1834, %v1843
        %v1858 = vadd.f32 %v1835, %v1843
        %v1859 = vadd.f32 %v1836, %v1843
        %v1860 = vadd.f32 %v1837, %v1843
        %v1861 = vmax.f32 %v1845, 0.0
        %v1862 = vmax.f32 %v1846, 0.0
        %v1863 = vmax.f32 %v1847, 0.0
        %v1864 = vmax.f32 %v1848, 0.0
        %v1865 = vmax.f32 %v1849, 0.0
        %v1866 = vmax.f32 %v1850, 0.0
        %v1867 = vmax.f32 %v1851, 0.0
        %v1868 = vmax.f32 %v1852, 0.0
        %v1869 = vmax.f32 %v1853, 0.0
        %v1870 = vmax.f32 %v1854, 0.0
        %v1871 = vmax.f32 %v1855, 0.0
        %v1872 = vmax.f32 %v1856, 0.0
        %v1873 = vmax.f32 %v1857, 0.0
        %v1874 = vmax.f32 %v1858, 0.0
        %v1875 = vmax.f32 %v1859, 0.0
        %v1876 = vmax.f32 %v1860, 0.0
        %v1877 = vpack.c.bf16 %v1862, %v1861
        %v1878 = vpack.c.bf16 %v1864, %v1863
        %v1879 = vpack.c.bf16 %v1866, %v1865
        %v1880 = vpack.c.bf16 %v1868, %v1867
        %v1881 = vpack.c.bf16 %v1870, %v1869
        %v1882 = vpack.c.bf16 %v1872, %v1871
        %v1883 = vpack.c.bf16 %v1874, %v1873
        %v1884 = vpack.c.bf16 %v1876, %v1875
        %v1885 = vld [vmem:[%s8] sm:$0xf]
        %v1886 = vld [vmem:[%s8 + $0x4] sm:$0xf]
        %v1887 = vld [vmem:[%s8 + $0x8] sm:$0xf]
        %v1888 = vld [vmem:[%s8 + $0xc] sm:$0xf]
        %v1893 = vunpack.c.l.b16 %v1885
        %v1894 = vunpack.c.l.b16 %v1886
        %v1895 = vunpack.c.l.b16 %v1887
        %v1896 = vunpack.c.l.b16 %v1888
        %v1897 = vpack.c.b16 %v1894, %v1893
        %v1898 = vpack.c.b16 %v1896, %v1895
        %v1902 = vsel %vm803, %v1877, 0
        %v1905 = vsel %vm803, %v1878, 0
        %v1908 = vsel %vm803, %v1879, 0
        %v1911 = vsel %vm803, %v1880, 0
        %v1914 = vsel %vm803, %v1881, 0
        %v1917 = vsel %vm803, %v1882, 0
        %v1920 = vsel %vm803, %v1883, 0
        %v1923 = vsel %vm803, %v1884, 0
        %1925 = vmatprep.subr.bf16.mxu0 0
        %1926 = vmatpush1.bf16.msra.mxu0 %v1897
        %1927 = vmatprep.subr.bf16.mxu0 0
        %1928 = vmatpush1.bf16.msra.mxu0 %v1898
        %1929 = vmatprep.subr.bf16.mxu0 0
        %1930 = vmatpush1.bf16.msra.mxu0 0
        %1931 = vmatprep.subr.bf16.mxu0 0
        %1932 = vmatpush1.bf16.msra.mxu0 0
        %1933 = vmatprep.subr.bf16.mxu0 0
        %1934 = vmatpush1.bf16.msra.mxu0 0
        %1935 = vmatprep.subr.bf16.mxu0 0
        %1936 = vmatpush1.bf16.msra.mxu0 0
        %1937 = vmatprep.subr.bf16.mxu0 0
        %1938 = vmatpush1.bf16.msra.mxu0 0
        %1939 = vmatprep.subr.bf16.mxu0 0
        %1940 = vmatpush1.bf16.msra.mxu0 0
        %1941 = vmatprep.subr.bf16.mxu0 0
        %1942 = vmatpush1.bf16.msra.mxu0 0
        %1943 = vmatprep.subr.bf16.mxu0 0
        %1944 = vmatpush1.bf16.msra.mxu0 0
        %1945 = vmatprep.subr.bf16.mxu0 0
        %1946 = vmatpush1.bf16.msra.mxu0 0
        %1947 = vmatprep.subr.bf16.mxu0 0
        %1948 = vmatpush1.bf16.msra.mxu0 0
        %1949 = vmatprep.subr.bf16.mxu0 0
        %1950 = vmatpush1.bf16.msra.mxu0 0
        %1951 = vmatprep.subr.bf16.mxu0 0
        %1952 = vmatpush1.bf16.msra.mxu0 0
        %1953 = vmatprep.subr.bf16.mxu0 0
        %1954 = vmatpush1.bf16.msra.mxu0 0
        %1955 = vmatprep.subr.bf16.mxu0 0
        %1956 = vmatpush1.bf16.msra.mxu0 0
        %1957 = vmatprep.mubr.bf16.mxu0 0
        %1958 = vmatmul.mubr.bf16.gmra.mrb[0].mxu0 %v1902
        %v1959 = vpop.f32.mrb[0].mxu0
        %v1960 = vadd.f32 0.0, %v1959
        %v1961 = vpop.f32.mrb[0].mxu0
        %v1962 = vpop.f32.mrb[0].mxu0
        %v1963 = vadd.f32 0.0, %v1962
        %v1964 = vpop.f32.mrb[0].mxu0
        %1965 = vmatprep.mubr.bf16.mxu0 0
        %1966 = vmatmul.mubr.bf16.gmra.mrb[0].mxu0 %v1905
        %v1967 = vpop.f32.mrb[0].mxu0
        %v1968 = vadd.f32 0.0, %v1967
        %v1969 = vpop.f32.mrb[0].mxu0
        %v1970 = vpop.f32.mrb[0].mxu0
        %v1971 = vadd.f32 0.0, %v1970
        %v1972 = vpop.f32.mrb[0].mxu0
        %1973 = vmatprep.mubr.bf16.mxu0 0
        %1974 = vmatmul.mubr.bf16.gmra.mrb[0].mxu0 %v1908
        %v1975 = vpop.f32.mrb[0].mxu0
        %v1976 = vadd.f32 0.0, %v1975
        %v1977 = vpop.f32.mrb[0].mxu0
        %v1978 = vpop.f32.mrb[0].mxu0
        %v1979 = vadd.f32 0.0, %v1978
        %v1980 = vpop.f32.mrb[0].mxu0
        %1981 = vmatprep.mubr.bf16.mxu0 0
        %1982 = vmatmul.mubr.bf16.gmra.mrb[0].mxu0 %v1911
        %v1983 = vpop.f32.mrb[0].mxu0
        %v1984 = vadd.f32 0.0, %v1983
        %v1985 = vpop.f32.mrb[0].mxu0
        %v1986 = vpop.f32.mrb[0].mxu0
        %v1987 = vadd.f32 0.0, %v1986
        %v1988 = vpop.f32.mrb[0].mxu0
        %1989 = vmatprep.mubr.bf16.mxu0 0
        %1990 = vmatmul.mubr.bf16.gmra.mrb[0].mxu0 %v1914
        %v1991 = vpop.f32.mrb[0].mxu0
        %v1992 = vadd.f32 0.0, %v1991
        %v1993 = vpop.f32.mrb[0].mxu0
        %v1994 = vpop.f32.mrb[0].mxu0
        %v1995 = vadd.f32 0.0, %v1994
        %v1996 = vpop.f32.mrb[0].mxu0
        %1997 = vmatprep.mubr.bf16.mxu0 0
        %1998 = vmatmul.mubr.bf16.gmra.mrb[0].mxu0 %v1917
        %v1999 = vpop.f32.mrb[0].mxu0
        %v2000 = vadd.f32 0.0, %v1999
        %v2001 = vpop.f32.mrb[0].mxu0
        %v2002 = vpop.f32.mrb[0].mxu0
        %v2003 = vadd.f32 0.0, %v2002
        %v2004 = vpop.f32.mrb[0].mxu0
        %2005 = vmatprep.mubr.bf16.mxu0 0
        %2006 = vmatmul.mubr.bf16.gmra.mrb[0].mxu0 %v1920
        %v2007 = vpop.f32.mrb[0].mxu0
        %v2008 = vadd.f32 0.0, %v2007
        %v2009 = vpop.f32.mrb[0].mxu0
        %v2010 = vpop.f32.mrb[0].mxu0
        %v2011 = vadd.f32 0.0, %v2010
        %v2012 = vpop.f32.mrb[0].mxu0
        %2013 = vmatprep.mubr.bf16.mxu0 0
        %2014 = vmatmul.mubr.bf16.gmra.mrb[0].mxu0 %v1923
        %v2015 = vpop.f32.mrb[0].mxu0
        %v2016 = vadd.f32 0.0, %v2015
        %v2017 = vpop.f32.mrb[0].mxu0
        %v2018 = vpop.f32.mrb[0].mxu0
        %v2019 = vadd.f32 0.0, %v2018
        %v2020 = vpop.f32.mrb[0].mxu0
        %2021 = vdwg.mxu0
        %v2022 = vld [vmem:[%s9] sm:$0x1]
        %v2024 = vlaneseq
        %v2025 = vshrl.u32 %v2024, 7
        %v2026 = vsub.s32 0, %v2025
        %v2027 = vrot.slane %v2022, %v2026
        %v2029 = vmul.f32 %v1960, %v2027
        %v2030 = vmul.f32 %v1963, %v2027
        %v2031 = vmul.f32 %v1968, %v2027
        %v2032 = vmul.f32 %v1971, %v2027
        %v2033 = vmul.f32 %v1976, %v2027
        %v2034 = vmul.f32 %v1979, %v2027
        %v2035 = vmul.f32 %v1984, %v2027
        %v2036 = vmul.f32 %v1987, %v2027
        %v2037 = vmul.f32 %v1992, %v2027
        %v2038 = vmul.f32 %v1995, %v2027
        %v2039 = vmul.f32 %v2000, %v2027
        %v2040 = vmul.f32 %v2003, %v2027
        %v2041 = vmul.f32 %v2008, %v2027
        %v2042 = vmul.f32 %v2011, %v2027
        %v2043 = vmul.f32 %v2016, %v2027
        %v2044 = vmul.f32 %v2019, %v2027
        %v2045 = vld [vmem:[%s10] sm:$0x1]
        %v2047 = vlaneseq
        %v2048 = vshrl.u32 %v2047, 7
        %v2049 = vsub.s32 0, %v2048
        %v2050 = vrot.slane %v2045, %v2049
        %v2052 = vadd.f32 %v2029, %v2050
        %v2053 = vadd.f32 %v2030, %v2050
        %v2054 = vadd.f32 %v2031, %v2050
        %v2055 = vadd.f32 %v2032, %v2050
        %v2056 = vadd.f32 %v2033, %v2050
        %v2057 = vadd.f32 %v2034, %v2050
        %v2058 = vadd.f32 %v2035, %v2050
        %v2059 = vadd.f32 %v2036, %v2050
        %v2060 = vadd.f32 %v2037, %v2050
        %v2061 = vadd.f32 %v2038, %v2050
        %v2062 = vadd.f32 %v2039, %v2050
        %v2063 = vadd.f32 %v2040, %v2050
        %v2064 = vadd.f32 %v2041, %v2050
        %v2065 = vadd.f32 %v2042, %v2050
        %v2066 = vadd.f32 %v2043, %v2050
        %v2067 = vadd.f32 %v2044, %v2050
        %v2068 = vld [vmem:[%s401] sm:$0xff]
        %v2069 = vld [vmem:[%s401 + $0x8] sm:$0xff]
        %v2070 = vld [vmem:[%s401 + $0x10] sm:$0xff]
        %v2071 = vld [vmem:[%s401 + $0x18] sm:$0xff]
        %v2072 = vld [vmem:[%s401 + $0x20] sm:$0xff]
        %v2073 = vld [vmem:[%s401 + $0x28] sm:$0xff]
        %v2074 = vld [vmem:[%s401 + $0x30] sm:$0xff]
        %v2075 = vld [vmem:[%s401 + $0x38] sm:$0xff]
        %v2076 = vld [vmem:[%s401 + $0x40] sm:$0xff]
        %v2077 = vld [vmem:[%s401 + $0x48] sm:$0xff]
        %v2078 = vld [vmem:[%s401 + $0x50] sm:$0xff]
        %v2079 = vld [vmem:[%s401 + $0x58] sm:$0xff]
        %v2080 = vld [vmem:[%s401 + $0x60] sm:$0xff]
        %v2081 = vld [vmem:[%s401 + $0x68] sm:$0xff]
        %v2082 = vld [vmem:[%s401 + $0x70] sm:$0xff]
        %v2083 = vld [vmem:[%s401 + $0x78] sm:$0xff]
        %v2084 = vadd.f32 %v2052, %v2068
        %v2085 = vadd.f32 %v2053, %v2069
        %v2086 = vadd.f32 %v2054, %v2070
        %v2087 = vadd.f32 %v2055, %v2071
        %v2088 = vadd.f32 %v2056, %v2072
        %v2089 = vadd.f32 %v2057, %v2073
        %v2090 = vadd.f32 %v2058, %v2074
        %v2091 = vadd.f32 %v2059, %v2075
        %v2092 = vadd.f32 %v2060, %v2076
        %v2093 = vadd.f32 %v2061, %v2077
        %v2094 = vadd.f32 %v2062, %v2078
        %v2095 = vadd.f32 %v2063, %v2079
        %v2096 = vadd.f32 %v2064, %v2080
        %v2097 = vadd.f32 %v2065, %v2081
        %v2098 = vadd.f32 %v2066, %v2082
        %v2099 = vadd.f32 %v2067, %v2083
        %v2100 = vmax.f32 %v2084, 0.0
        %v2101 = vmax.f32 %v2085, 0.0
        %v2102 = vmax.f32 %v2086, 0.0
        %v2103 = vmax.f32 %v2087, 0.0
        %v2104 = vmax.f32 %v2088, 0.0
        %v2105 = vmax.f32 %v2089, 0.0
        %v2106 = vmax.f32 %v2090, 0.0
        %v2107 = vmax.f32 %v2091, 0.0
        %v2108 = vmax.f32 %v2092, 0.0
        %v2109 = vmax.f32 %v2093, 0.0
        %v2110 = vmax.f32 %v2094, 0.0
        %v2111 = vmax.f32 %v2095, 0.0
        %v2112 = vmax.f32 %v2096, 0.0
        %v2113 = vmax.f32 %v2097, 0.0
        %v2114 = vmax.f32 %v2098, 0.0
        %v2115 = vmax.f32 %v2099, 0.0
        %2116 = vst [vmem:[%s448] sm:$0xff] %v2100
        %2117 = vst [vmem:[%s448 + $0x8] sm:$0xff] %v2101
        %2118 = vst [vmem:[%s448 + $0x10] sm:$0xff] %v2102
        %2119 = vst [vmem:[%s448 + $0x18] sm:$0xff] %v2103
        %2120 = vst [vmem:[%s448 + $0x20] sm:$0xff] %v2104
        %2121 = vst [vmem:[%s448 + $0x28] sm:$0xff] %v2105
        %2122 = vst [vmem:[%s448 + $0x30] sm:$0xff] %v2106
        %2123 = vst [vmem:[%s448 + $0x38] sm:$0xff] %v2107
        %2124 = vst [vmem:[%s448 + $0x40] sm:$0xff] %v2108
        %2125 = vst [vmem:[%s448 + $0x48] sm:$0xff] %v2109
        %2126 = vst [vmem:[%s448 + $0x50] sm:$0xff] %v2110
        %2127 = vst [vmem:[%s448 + $0x58] sm:$0xff] %v2111
        %2128 = vst [vmem:[%s448 + $0x60] sm:$0xff] %v2112
        %2129 = vst [vmem:[%s448 + $0x68] sm:$0xff] %v2113
        %2130 = vst [vmem:[%s448 + $0x70] sm:$0xff] %v2114
        %2131 = vst [vmem:[%s448 + $0x78] sm:$0xff] %v2115
        %s2132 = sand.u32 %s295, 1
        %s2133 = scalar_lea.sflag [#allocation5], %s2132
        %s2134 = sand.u32 %s295, 1
        %s2135 = smul.addr %s2134, 128
        %s2136 = scalar_lea.vmem [#allocation6], %s2135
        // Predicated region
        $region69: #{tpu_custom_call.1} parent=63 // pred_check
          %p2137 = pneg %p305
        $region70: #{tpu_custom_call.1} parent=63 // pred_check_branch
          %2139 = sbr.rel (%p2137) target = $region72
        $region71: #{tpu_custom_call.1} parent=63 // pred_region
          %s2140 = smul.u32 8, %s33
          %s2142 = ssub.s32 2048, 2048
          %2143 = vsyncadd %s2133, %s2142
          %s2144 = smul.addr %s2140, 2
          %s2145 = smul.addr %s32, 32
          %s2146 = sadd.s32 %s2144, %s2145
          %s2147 = smul.addr %s2146, 128
          %s2148 = scalar_lea.hbm %s11, %s2147
          %s2149 = sshll.u32 %s2136, 4
          %s2150 = int_to_ptr.vmem [resolvable:$true] %s2149
          %2155 = dma.vmem_to_hbm [thread:$0]  %s2150, 2048, %s2148, %s2133, 128, 128, 8
        $region72: #{tpu_custom_call.1} parent=63 // pred_fallthru
          _
      $region64: #{tpu_custom_call.1} parent=5 // pred_fallthru
        _
      %p2156 = scmp.le.s32.totalorder 2, %s23
      // Predicated region
      $region73: #{tpu_custom_call.1} parent=5 // pred_check
        %p2157 = pneg %p2156
      $region74: #{tpu_custom_call.1} parent=5 // pred_check_branch
        %2159 = sbr.rel (%p2157) target = $region76
      $region75: #{tpu_custom_call.1} parent=5 // pred_region
        %s2160 = ssub.s32 %s23, 2
        // Predicated region
        $region77: #{tpu_custom_call.1} parent=75 // pred_check
          %p2161 = pneg %p311
        $region78: #{tpu_custom_call.1} parent=75 // pred_check_branch
          %2163 = sbr.rel (%p2161) target = $region80
        $region79: #{tpu_custom_call.1} parent=75 // pred_region
          %s2164 = sand.u32 %s296, 1
          %s2165 = scalar_lea.sflag [#allocation5], %s2164
          %s2166 = sand.u32 %s296, 1
          %s2167 = smul.addr %s2166, 128
          %s2168 = scalar_lea.vmem [#allocation6], %s2167
          %2169 = dma.done %s2165, 2048
        $region80: #{tpu_custom_call.1} parent=75 // pred_fallthru
          _
      $region76: #{tpu_custom_call.1} parent=5 // pred_fallthru
        _
    $region6: #{tpu_custom_call.1} parent=1 // loop_footer
      %s27 = sadd.s32 1, %s23
    $region7: #{tpu_custom_call.1} parent=1 // loop_footer_branch
      %22 = sbr.rel target = $region3
    $region8: #{tpu_custom_call.1} parent=1 // loop_exit
      _
    %2170 = vsyncpa [#allocation4], 1
    %s2171 = scalar_lea.sflag [#allocation4], 1
    %2172 = vsyncpa %s2171, 1
    %2173 = vsyncpa [#allocation5], 1
    %s2174 = scalar_lea.sflag [#allocation5], 1
    %2175 = vsyncpa %s2174, 1

</llo_original>
